<compile_context>
chip_gen: v7x
topology: tpu7x:2x2x1
jax: 0.10.0
libtpu: 0.0.40
codegen_flags: <defaults>
</compile_context>

<pallas_src>
import functools

import numpy as np
import jax
import jax.numpy as jnp
from jax.experimental import pallas as pl
from jax.experimental.pallas import tpu as pltpu


def _bilinear_up2_matrix(n: int) -> np.ndarray:
    """(2n, n) matrix reproducing torch.nn.Upsample(scale_factor=2, mode='bilinear',
    align_corners=False) along one axis (includes edge clamping)."""
    m = np.zeros((2 * n, n), dtype=np.float32)
    for p in range(2 * n):
        src = max((p + 0.5) / 2.0 - 0.5, 0.0)   # PyTorch clamps negative source coords
        i0 = int(np.floor(src))
        i1 = min(i0 + 1, n - 1)
        f = src - i0
        m[p, i0] += 1.0 - f
        m[p, i1] += f
    return m


def _vmem_budget():
    """(vmem_limit_bytes, per-step pipelined-buffer budget) — generation aware."""
    try:
        vmem = int(pltpu.get_tpu_info().vmem_capacity_bytes)
    except Exception:
        vmem = 64 * 2 ** 20                      # conservative (v7x-sized) fallback
    if vmem >= 100 * 2 ** 20:                    # v5e / v6e: 128 MiB physical
        return 96 * 2 ** 20, 48 * 2 ** 20
    return int(min(vmem - 16 * 2 ** 20, 48 * 2 ** 20)), 16 * 2 ** 20


def _choose_tile_h(H, W, bytes_per_row, tile_budget, n_batch, max_rows=128):
    """Largest multiple-of-8 row tile dividing H that fits the per-step VMEM budget."""
    if H % 8 != 0 or W % 16 != 0:                # keep blocks (8,128)-legal, else 1 tile
        return H
    cands = [t for t in range(8, min(H, max_rows) + 1, 8)
             if H % t == 0 and t * bytes_per_row <= tile_budget]
    if not cands:
        return 8
    th = max(cands)
    # v7x megacore: keep >= 2 grid steps when batch == 1 so both TCs get work.
    if n_batch == 1 and th == H and H >= 16:
        smaller = [t for t in cands if t <= H // 2]
        if smaller:
            th = max(smaller)
    return th


def _make_kernel(*, upsample, has_prev, conv_mode, n_out, n_in, th, w):
    """Kernel body for the (upsample, has_prev, conv_mode) variant."""

    def conv(mod_ref, xv):
        """Modulated 1x1 conv over channels: (O, C) x (C, N) -> (O, N) float32."""
        if conv_mode == "mxu":
            m = mod_ref[0].astype(xv.dtype)                    # (O, C) VMEM tile
            return jnp.dot(m, xv, preferred_element_type=jnp.float32)
        # VPU path (small C): O running sums, weights as scalars from SMEM (free splat).
        b = pl.program_id(0)
        xf = xv.astype(jnp.float32)
        accs = [None] * n_out
        for c in range(n_in):
            xc = xf[c]
            for o in range(n_out):
                t = mod_ref[b, o * n_in + c] * xc
                accs[o] = t if accs[o] is None else accs[o] + t
        return jnp.stack(accs, axis=0)

    def kernel(*refs):
        if upsample:
            if has_prev:
                (mod_ref, uw_ref, x_ref, xt_ref, xb_ref,
                 p_ref, pt_ref, pb_ref, out_ref) = refs
            else:
                mod_ref, uw_ref, x_ref, xt_ref, xb_ref, out_ref = refs
                p_ref = pt_ref = pb_ref = None
        else:
            if has_prev:
                mod_ref, x_ref, p_ref, out_ref = refs
            else:
                mod_ref, x_ref, out_ref = refs
                p_ref = None

        # --- 1x1 modulated conv on the flat (C, th*W) tile ------------------------
        z_flat = conv(mod_ref, x_ref[0])                        # (O, th*W) f32
        if p_ref is not None:
            z_flat = z_flat + p_ref[0].astype(jnp.float32)

        if not upsample:
            out_ref[0] = z_flat.astype(out_ref.dtype)
            return

        # conv + residual for the one-row clamped halos (rows tile_start-1 / tile_end)
        z_top = conv(mod_ref, xt_ref[0, 0])                     # (O, W) f32
        z_bot = conv(mod_ref, xb_ref[0, 0])
        if pt_ref is not None:
            z_top = z_top + pt_ref[0, 0].astype(jnp.float32)
            z_bot = z_bot + pb_ref[0, 0].astype(jnp.float32)

        # rows-on-sublanes layout (relayout touches only the small O-channel result)
        z = jnp.stack(jnp.split(z_flat, th, axis=-1), axis=1)   # (O, th, W)

        # --- 2x bilinear along H: fixed 0.25 / 0.75 blend on the VPU ---------------
        if th > 1:
            z_up = jnp.concatenate([z_top[:, None, :], z[:, :-1, :]], axis=1)
            z_dn = jnp.concatenate([z[:, 1:, :], z_bot[:, None, :]], axis=1)
        else:
            z_up = z_top[:, None, :]
            z_dn = z_bot[:, None, :]
        even = 0.25 * z_up + 0.75 * z                           # output rows 2r
        odd = 0.75 * z + 0.25 * z_dn                            # output rows 2r+1

        # interleave even/odd rows BEFORE the W matmul (half the bytes to shuffle),
        # so the store below is a single dense (2*th, 2W) block (no masked vst).
        parts = []
        for r in range(th):
            parts.append(even[:, r:r + 1, :])
            parts.append(odd[:, r:r + 1, :])
        zi = jnp.concatenate(parts, axis=1)                     # (O, 2*th, W)

        # --- 2x bilinear along W: ONE fused lane-dense MXU matmul, M = 2*O*th -------
        # TODO(synk): for very large W (>= 2048) tile the banded (W, 2W) matrix into
        # fixed column blocks so VMEM and FLOPs stay linear in W.
        lhs_dtype = (jnp.bfloat16
                     if np.dtype(x_ref.dtype) == np.dtype(jnp.bfloat16)
                     else jnp.float32)
        rhs = uw_ref[...].astype(lhs_dtype)                     # (W, 2W)
        if (2 * th) % 8 == 0:
            y = jnp.dot(zi.reshape(n_out * 2 * th, w).astype(lhs_dtype), rhs,
                        preferred_element_type=jnp.float32)     # (2*O*th, 2W)
            out_ref[0] = y.reshape(n_out, 2 * th, 2 * w).astype(out_ref.dtype)
        else:
            ys = [jnp.dot(zi[o].astype(lhs_dtype), rhs,
                          preferred_element_type=jnp.float32) for o in range(n_out)]
            out_ref[0] = jnp.stack(ys, axis=0).astype(out_ref.dtype)

    return kernel


@functools.partial(jax.jit,
                   static_argnames=("upsample", "out_dtype", "tile_h", "conv_mode"))
def rgb_block_forward(x, prev_rgb, istyle, wl, bl, wc, *, upsample=True,
                      out_dtype=jnp.float32, tile_h=None, conv_mode=None):
    """Pallas TPU implementation of RGBBlock.forward.

    x        : (B, C, H, W)   feature map (NCHW), f32 or bf16 (used as-is, no casts)
    prev_rgb : (B, O, H, W)   previous RGB, or None
    istyle   : (B, latent_dim)
    wl, bl   : to_style Linear params, shapes (C, latent_dim), (C,)
    wc       : Conv2DMod 1x1 weight, shape (O, C)  (== (O, C, 1, 1) squeezed)

    Returns out_dtype (B, O, 2H, 2W) if upsample else (B, O, H, W).
    """
    B, C, H, W = x.shape
    O = wc.shape[0]
    wc2 = wc.reshape(O, C)

    # --- tiny per-batch style Linear + weight modulation hoisted to XLA ------------
    style = istyle.astype(jnp.float32) @ wl.astype(jnp.float32).T + bl.astype(jnp.float32)
    mod = wc2.astype(jnp.float32)[None, :, :] * (style[:, None, :] + 1.0)   # (B, O, C)

    if conv_mode is None:
        conv_mode = "mxu" if C >= 32 else "vpu"
    if conv_mode not in ("mxu", "vpu"):
        raise ValueError(f"conv_mode must be 'mxu' or 'vpu', got {conv_mode}")

    has_prev = prev_rgb is not None
    x_isz = np.dtype(x.dtype).itemsize
    o_isz = np.dtype(out_dtype).itemsize
    p_isz = np.dtype(prev_rgb.dtype).itemsize if has_prev else 0

    vmem_limit, tile_budget = _vmem_budget()
    # pipelined VMEM bytes per input row (x2 = double buffering of in/out blocks)
    bytes_per_row = 2 * C * W * x_isz
    if has_prev:
        bytes_per_row += 2 * O * W * p_isz
    bytes_per_row += 2 * O * (2 * W) * 2 * o_isz if upsample else 2 * O * W * o_isz
    # VPU path keeps its O accumulators roughly vreg-resident -> smaller row cap.
    max_rows = 128 if conv_mode == "mxu" else max(8, min(128, (8192 // max(W, 1)) // 8 * 8))

    if tile_h is None:
        th = _choose_tile_h(H, W, bytes_per_row, tile_budget, B, max_rows)
    else:
        th = int(tile_h)
    if H % th != 0:
        raise ValueError(f"tile_h={th} must divide H={H}")
    nH = H // th
    if nH > 1 and (th * W) % 128 != 0:
        th, nH = H, 1                      # keep flat blocks lane-aligned

    x_flat = x.reshape(B, C, H * W)        # free view: trailing dims are contiguous
    x_spec = pl.BlockSpec((1, C, th * W), lambda b, h: (b, 0, h))

    if conv_mode == "vpu":
        mod_in = mod.reshape(B, O * C)                       # whole array in SMEM
        mod_spec = pl.BlockSpec(memory_space=pltpu.MemorySpace.SMEM)
    else:
        mod_in = mod                                         # (B, O, C) VMEM tile
        mod_spec = pl.BlockSpec((1, O, C), lambda b, h: (b, 0, 0))

    cparams = pltpu.CompilerParams(
        dimension_semantics=("parallel", "parallel"),
        vmem_limit_bytes=int(vmem_limit),
    )

    kernel = _make_kernel(upsample=upsample, has_prev=has_prev, conv_mode=conv_mode,
                          n_out=O, n_in=C, th=th, w=W)

    if not upsample:
        ins = [mod_in, x_flat]
        in_specs = [mod_spec, x_spec]
        if has_prev:
            ins.append(prev_rgb.reshape(B, O, H * W))
            in_specs.append(pl.BlockSpec((1, O, th * W), lambda b, h: (b, 0, h)))
        out_flat = pl.pallas_call(
            kernel,
            out_shape=jax.ShapeDtypeStruct((B, O, H * W), out_dtype),
            grid=(B, nH),
            in_specs=in_specs,
            out_specs=pl.BlockSpec((1, O, th * W), lambda b, h: (b, 0, h)),
            compiler_params=cparams,
        )(*ins)
        return out_flat.reshape(B, O, H, W)

    # --- upsample path --------------------------------------------------------------
    # One-row halos (rows tile_start-1 / tile_end, clamped) gathered in the wrapper
    # so the H blend never needs a neighbouring tile's block.  Tiny arrays.
    tidx = np.arange(nH)
    top_rows = np.maximum(tidx * th - 1, 0)
    bot_rows = np.minimum((tidx + 1) * th, H - 1)
    x_top = jnp.transpose(x[:, :, top_rows, :], (0, 2, 1, 3))        # (B, nH, C, W)
    x_bot = jnp.transpose(x[:, :, bot_rows, :], (0, 2, 1, 3))
    xh_spec = pl.BlockSpec((1, 1, C, W), lambda b, h: (b, h, 0, 0))

    # bf16 is exact for the {0, .25, .5, .75, 1} weights -> half the VMEM/DMA footprint.
    uwT = jnp.asarray(_bilinear_up2_matrix(W).T, dtype=jnp.bfloat16)  # (W, 2W)
    uw_spec = pl.BlockSpec((W, 2 * W), lambda b, h: (0, 0),
                           pipeline_mode=pl.Buffered(1))

    ins = [mod_in, uwT, x_flat, x_top, x_bot]
    in_specs = [mod_spec, uw_spec, x_spec, xh_spec, xh_spec]
    if has_prev:
        p_flat = prev_rgb.reshape(B, O, H * W)
        p_top = jnp.transpose(prev_rgb[:, :, top_rows, :], (0, 2, 1, 3))   # (B, nH, O, W)
        p_bot = jnp.transpose(prev_rgb[:, :, bot_rows, :], (0, 2, 1, 3))
        ins += [p_flat, p_top, p_bot]
        in_specs += [pl.BlockSpec((1, O, th * W), lambda b, h: (b, 0, h)),
                     pl.BlockSpec((1, 1, O, W), lambda b, h: (b, h, 0, 0)),
                     pl.BlockSpec((1, 1, O, W), lambda b, h: (b, h, 0, 0))]

    return pl.pallas_call(
        kernel,
        out_shape=jax.ShapeDtypeStruct((B, O, 2 * H, 2 * W), out_dtype),
        grid=(B, nH),
        in_specs=in_specs,
        out_specs=pl.BlockSpec((1, O, 2 * th, 2 * W), lambda b, h: (b, 0, h, 0)),
        compiler_params=cparams,
    )(*ins)


def ref_forward(x, prev_rgb, istyle, wl, bl, wc, *, upsample=True):
    """Pure-JAX reference mirroring the PyTorch RGBBlock semantics."""
    style = istyle @ wl.T + bl
    mod = wc[None, :, :] * (style[:, None, :] + 1.0)
    y = jnp.einsum('boc,bchw->bohw', mod, x)
    if prev_rgb is not None:
        y = y + prev_rgb
    if upsample:
        _, _, H, W = y.shape
        uh = jnp.asarray(_bilinear_up2_matrix(H))
        uw = jnp.asarray(_bilinear_up2_matrix(W))
        y = jnp.einsum('ph,bohw->bopw', uh, y)
        y = jnp.einsum('qw,bopw->bopq', uw, y)
    return y


if __name__ == "__main__":
    key = jax.random.PRNGKey(0)
    B, C, H, W = 2, 8, 16, 16       # batch, input_channel, spatial
    latent_dim = 32
    O = 3                           # rgba=False -> 3 output filters

    k = jax.random.split(key, 6)
    x = jax.random.normal(k[0], (B, C, H, W), jnp.float32)
    prev_rgb = jax.random.normal(k[1], (B, O, H, W), jnp.float32)
    istyle = jax.random.normal(k[2], (B, latent_dim), jnp.float32)

    # to_style = nn.Linear(latent_dim, C): U(-1/sqrt(L), 1/sqrt(L)) init
    bound = 1.0 / np.sqrt(latent_dim)
    wl = jax.random.uniform(k[3], (C, latent_dim), jnp.float32, -bound, bound)
    bl = jax.random.uniform(k[4], (C,), jnp.float32, -bound, bound)
    # Conv2DMod weight (O, C, 1, 1): kaiming_normal fan_in -> std = sqrt(2/C)
    wc = jax.random.normal(k[5], (O, C), jnp.float32) * np.sqrt(2.0 / C)

    ref_up = ref_forward(x, prev_rgb, istyle, wl, bl, wc, upsample=True)

    # 1) upsample + residual, VPU conv path, tile_h=8 -> grid (2, 2): exercises halos
    out = jax.block_until_ready(
        rgb_block_forward(x, prev_rgb, istyle, wl, bl, wc,
                          upsample=True, tile_h=8, conv_mode="vpu"))
    assert out.shape == (B, O, 2 * H, 2 * W)
    np.testing.assert_allclose(np.asarray(out), np.asarray(ref_up), rtol=1e-4, atol=1e-4)

    # 2) upsample, prev_rgb=None, default tiling (single H tile: clamped-edge halos)
    out2 = jax.block_until_ready(
        rgb_block_forward(x, None, istyle, wl, bl, wc, upsample=True))
    ref2 = ref_forward(x, None, istyle, wl, bl, wc, upsample=True)
    np.testing.assert_allclose(np.asarray(out2), np.asarray(ref2), rtol=1e-4, atol=1e-4)

    # 3) no upsample + residual
    out3 = jax.block_until_ready(
        rgb_block_forward(x, prev_rgb, istyle, wl, bl, wc, upsample=False))
    ref3 = ref_forward(x, prev_rgb, istyle, wl, bl, wc, upsample=False)
    np.testing.assert_allclose(np.asarray(out3), np.asarray(ref3), rtol=1e-4, atol=1e-4)

    # 4) MXU conv path (default for C >= 32), f32 inputs
    out4 = jax.block_until_ready(
        rgb_block_forward(x, prev_rgb, istyle, wl, bl, wc,
                          upsample=True, tile_h=8, conv_mode="mxu"))
    np.testing.assert_allclose(np.asarray(out4), np.asarray(ref_up), rtol=2e-3, atol=2e-3)

    # 5) bf16 inputs from the caller + bf16 output (no wrapper-side casts)
    out5 = jax.block_until_ready(
        rgb_block_forward(x.astype(jnp.bfloat16), prev_rgb.astype(jnp.bfloat16),
                          istyle, wl, bl, wc, upsample=True, tile_h=8,
                          conv_mode="mxu", out_dtype=jnp.bfloat16))
    np.testing.assert_allclose(np.asarray(out5.astype(jnp.float32)),
                               np.asarray(ref_up), rtol=5e-2, atol=1e-1)

    print("KERNEL_OK")
</pallas_src>

<mosaic_0001>
module attributes {stable_mosaic.version = 11 : i64} {
  func.func @kernel(%arg0: i32, %arg1: i32, %arg2: memref<2x24xf32, #tpu.memory_space<smem>>, %arg3: memref<16x32xbf16, #tpu.memory_space<vmem>>, %arg4: memref<1x8x128xf32, #tpu.memory_space<vmem>>, %arg5: memref<1x1x8x16xf32, #tpu.memory_space<vmem>>, %arg6: memref<1x1x8x16xf32, #tpu.memory_space<vmem>>, %arg7: memref<1x3x128xf32, #tpu.memory_space<vmem>>, %arg8: memref<1x1x3x16xf32, #tpu.memory_space<vmem>>, %arg9: memref<1x1x3x16xf32, #tpu.memory_space<vmem>>, %arg10: memref<1x3x16x32xf32, #tpu.memory_space<vmem>>) attributes {dimension_semantics = [#tpu.dimension_semantics<parallel>, #tpu.dimension_semantics<parallel>], iteration_bounds = array<i64: 2, 2>, scalar_prefetch = 0 : i64, scratch_operands = 0 : i64, tpu.core_type = #tpu.core_type<tc>, window_params = [{transform_indices = @transform_0, window_bounds = array<i64: 2, 24>}, {pipeline_mode = #tpu.pipeline_mode<synchronous>, transform_indices = @transform_1, window_bounds = array<i64: 16, 32>}, {transform_indices = @transform_2, window_bounds = array<i64: 1, 8, 128>}, {transform_indices = @transform_3, window_bounds = array<i64: 1, 1, 8, 16>}, {transform_indices = @transform_4, window_bounds = array<i64: 1, 1, 8, 16>}, {transform_indices = @transform_5, window_bounds = array<i64: 1, 3, 128>}, {transform_indices = @transform_6, window_bounds = array<i64: 1, 1, 3, 16>}, {transform_indices = @transform_7, window_bounds = array<i64: 1, 1, 3, 16>}, {transform_indices = @transform_8, window_bounds = array<i64: 1, 3, 16, 32>}]} {
    %c0 = arith.constant 0 : index
    %c0_0 = arith.constant 0 : index
    %c0_1 = arith.constant 0 : index
    %0 = vector.load %arg4[%c0, %c0_0, %c0_1] : memref<1x8x128xf32, #tpu.memory_space<vmem>>, vector<1x8x128xf32>
    %1 = vector.shape_cast %0 : vector<1x8x128xf32> to vector<8x128xf32>
    %2 = vector.extract_strided_slice %1 {offsets = [0, 0], sizes = [1, 128], strides = [1, 1]} : vector<8x128xf32> to vector<1x128xf32>
    %3 = vector.shape_cast %2 : vector<1x128xf32> to vector<128xf32>
    %4 = arith.index_cast %arg0 : i32 to index
    %c0_2 = arith.constant 0 : index
    %5 = memref.load %arg2[%4, %c0_2] : memref<2x24xf32, #tpu.memory_space<smem>>
    %6 = vector.broadcast %5 : f32 to vector<128xf32>
    %7 = arith.mulf %6, %3 : vector<128xf32>
    %8 = arith.index_cast %arg0 : i32 to index
    %c8 = arith.constant 8 : index
    %9 = memref.load %arg2[%8, %c8] : memref<2x24xf32, #tpu.memory_space<smem>>
    %10 = vector.broadcast %9 : f32 to vector<128xf32>
    %11 = arith.mulf %10, %3 : vector<128xf32>
    %12 = arith.index_cast %arg0 : i32 to index
    %c16 = arith.constant 16 : index
    %13 = memref.load %arg2[%12, %c16] : memref<2x24xf32, #tpu.memory_space<smem>>
    %14 = vector.broadcast %13 : f32 to vector<128xf32>
    %15 = arith.mulf %14, %3 : vector<128xf32>
    %16 = vector.extract_strided_slice %1 {offsets = [1, 0], sizes = [1, 128], strides = [1, 1]} : vector<8x128xf32> to vector<1x128xf32>
    %17 = vector.shape_cast %16 : vector<1x128xf32> to vector<128xf32>
    %18 = arith.index_cast %arg0 : i32 to index
    %c1 = arith.constant 1 : index
    %19 = memref.load %arg2[%18, %c1] : memref<2x24xf32, #tpu.memory_space<smem>>
    %20 = vector.broadcast %19 : f32 to vector<128xf32>
    %21 = arith.mulf %20, %17 : vector<128xf32>
    %22 = arith.addf %7, %21 : vector<128xf32>
    %23 = arith.index_cast %arg0 : i32 to index
    %c9 = arith.constant 9 : index
    %24 = memref.load %arg2[%23, %c9] : memref<2x24xf32, #tpu.memory_space<smem>>
    %25 = vector.broadcast %24 : f32 to vector<128xf32>
    %26 = arith.mulf %25, %17 : vector<128xf32>
    %27 = arith.addf %11, %26 : vector<128xf32>
    %28 = arith.index_cast %arg0 : i32 to index
    %c17 = arith.constant 17 : index
    %29 = memref.load %arg2[%28, %c17] : memref<2x24xf32, #tpu.memory_space<smem>>
    %30 = vector.broadcast %29 : f32 to vector<128xf32>
    %31 = arith.mulf %30, %17 : vector<128xf32>
    %32 = arith.addf %15, %31 : vector<128xf32>
    %33 = vector.extract_strided_slice %1 {offsets = [2, 0], sizes = [1, 128], strides = [1, 1]} : vector<8x128xf32> to vector<1x128xf32>
    %34 = vector.shape_cast %33 : vector<1x128xf32> to vector<128xf32>
    %35 = arith.index_cast %arg0 : i32 to index
    %c2 = arith.constant 2 : index
    %36 = memref.load %arg2[%35, %c2] : memref<2x24xf32, #tpu.memory_space<smem>>
    %37 = vector.broadcast %36 : f32 to vector<128xf32>
    %38 = arith.mulf %37, %34 : vector<128xf32>
    %39 = arith.addf %22, %38 : vector<128xf32>
    %40 = arith.index_cast %arg0 : i32 to index
    %c10 = arith.constant 10 : index
    %41 = memref.load %arg2[%40, %c10] : memref<2x24xf32, #tpu.memory_space<smem>>
    %42 = vector.broadcast %41 : f32 to vector<128xf32>
    %43 = arith.mulf %42, %34 : vector<128xf32>
    %44 = arith.addf %27, %43 : vector<128xf32>
    %45 = arith.index_cast %arg0 : i32 to index
    %c18 = arith.constant 18 : index
    %46 = memref.load %arg2[%45, %c18] : memref<2x24xf32, #tpu.memory_space<smem>>
    %47 = vector.broadcast %46 : f32 to vector<128xf32>
    %48 = arith.mulf %47, %34 : vector<128xf32>
    %49 = arith.addf %32, %48 : vector<128xf32>
    %50 = vector.extract_strided_slice %1 {offsets = [3, 0], sizes = [1, 128], strides = [1, 1]} : vector<8x128xf32> to vector<1x128xf32>
    %51 = vector.shape_cast %50 : vector<1x128xf32> to vector<128xf32>
    %52 = arith.index_cast %arg0 : i32 to index
    %c3 = arith.constant 3 : index
    %53 = memref.load %arg2[%52, %c3] : memref<2x24xf32, #tpu.memory_space<smem>>
    %54 = vector.broadcast %53 : f32 to vector<128xf32>
    %55 = arith.mulf %54, %51 : vector<128xf32>
    %56 = arith.addf %39, %55 : vector<128xf32>
    %57 = arith.index_cast %arg0 : i32 to index
    %c11 = arith.constant 11 : index
    %58 = memref.load %arg2[%57, %c11] : memref<2x24xf32, #tpu.memory_space<smem>>
    %59 = vector.broadcast %58 : f32 to vector<128xf32>
    %60 = arith.mulf %59, %51 : vector<128xf32>
    %61 = arith.addf %44, %60 : vector<128xf32>
    %62 = arith.index_cast %arg0 : i32 to index
    %c19 = arith.constant 19 : index
    %63 = memref.load %arg2[%62, %c19] : memref<2x24xf32, #tpu.memory_space<smem>>
    %64 = vector.broadcast %63 : f32 to vector<128xf32>
    %65 = arith.mulf %64, %51 : vector<128xf32>
    %66 = arith.addf %49, %65 : vector<128xf32>
    %67 = vector.extract_strided_slice %1 {offsets = [4, 0], sizes = [1, 128], strides = [1, 1]} : vector<8x128xf32> to vector<1x128xf32>
    %68 = vector.shape_cast %67 : vector<1x128xf32> to vector<128xf32>
    %69 = arith.index_cast %arg0 : i32 to index
    %c4 = arith.constant 4 : index
    %70 = memref.load %arg2[%69, %c4] : memref<2x24xf32, #tpu.memory_space<smem>>
    %71 = vector.broadcast %70 : f32 to vector<128xf32>
    %72 = arith.mulf %71, %68 : vector<128xf32>
    %73 = arith.addf %56, %72 : vector<128xf32>
    %74 = arith.index_cast %arg0 : i32 to index
    %c12 = arith.constant 12 : index
    %75 = memref.load %arg2[%74, %c12] : memref<2x24xf32, #tpu.memory_space<smem>>
    %76 = vector.broadcast %75 : f32 to vector<128xf32>
    %77 = arith.mulf %76, %68 : vector<128xf32>
    %78 = arith.addf %61, %77 : vector<128xf32>
    %79 = arith.index_cast %arg0 : i32 to index
    %c20 = arith.constant 20 : index
    %80 = memref.load %arg2[%79, %c20] : memref<2x24xf32, #tpu.memory_space<smem>>
    %81 = vector.broadcast %80 : f32 to vector<128xf32>
    %82 = arith.mulf %81, %68 : vector<128xf32>
    %83 = arith.addf %66, %82 : vector<128xf32>
    %84 = vector.extract_strided_slice %1 {offsets = [5, 0], sizes = [1, 128], strides = [1, 1]} : vector<8x128xf32> to vector<1x128xf32>
    %85 = vector.shape_cast %84 : vector<1x128xf32> to vector<128xf32>
    %86 = arith.index_cast %arg0 : i32 to index
    %c5 = arith.constant 5 : index
    %87 = memref.load %arg2[%86, %c5] : memref<2x24xf32, #tpu.memory_space<smem>>
    %88 = vector.broadcast %87 : f32 to vector<128xf32>
    %89 = arith.mulf %88, %85 : vector<128xf32>
    %90 = arith.addf %73, %89 : vector<128xf32>
    %91 = arith.index_cast %arg0 : i32 to index
    %c13 = arith.constant 13 : index
    %92 = memref.load %arg2[%91, %c13] : memref<2x24xf32, #tpu.memory_space<smem>>
    %93 = vector.broadcast %92 : f32 to vector<128xf32>
    %94 = arith.mulf %93, %85 : vector<128xf32>
    %95 = arith.addf %78, %94 : vector<128xf32>
    %96 = arith.index_cast %arg0 : i32 to index
    %c21 = arith.constant 21 : index
    %97 = memref.load %arg2[%96, %c21] : memref<2x24xf32, #tpu.memory_space<smem>>
    %98 = vector.broadcast %97 : f32 to vector<128xf32>
    %99 = arith.mulf %98, %85 : vector<128xf32>
    %100 = arith.addf %83, %99 : vector<128xf32>
    %101 = vector.extract_strided_slice %1 {offsets = [6, 0], sizes = [1, 128], strides = [1, 1]} : vector<8x128xf32> to vector<1x128xf32>
    %102 = vector.shape_cast %101 : vector<1x128xf32> to vector<128xf32>
    %103 = arith.index_cast %arg0 : i32 to index
    %c6 = arith.constant 6 : index
    %104 = memref.load %arg2[%103, %c6] : memref<2x24xf32, #tpu.memory_space<smem>>
    %105 = vector.broadcast %104 : f32 to vector<128xf32>
    %106 = arith.mulf %105, %102 : vector<128xf32>
    %107 = arith.addf %90, %106 : vector<128xf32>
    %108 = arith.index_cast %arg0 : i32 to index
    %c14 = arith.constant 14 : index
    %109 = memref.load %arg2[%108, %c14] : memref<2x24xf32, #tpu.memory_space<smem>>
    %110 = vector.broadcast %109 : f32 to vector<128xf32>
    %111 = arith.mulf %110, %102 : vector<128xf32>
    %112 = arith.addf %95, %111 : vector<128xf32>
    %113 = arith.index_cast %arg0 : i32 to index
    %c22 = arith.constant 22 : index
    %114 = memref.load %arg2[%113, %c22] : memref<2x24xf32, #tpu.memory_space<smem>>
    %115 = vector.broadcast %114 : f32 to vector<128xf32>
    %116 = arith.mulf %115, %102 : vector<128xf32>
    %117 = arith.addf %100, %116 : vector<128xf32>
    %118 = vector.extract_strided_slice %1 {offsets = [7, 0], sizes = [1, 128], strides = [1, 1]} : vector<8x128xf32> to vector<1x128xf32>
    %119 = vector.shape_cast %118 : vector<1x128xf32> to vector<128xf32>
    %120 = arith.index_cast %arg0 : i32 to index
    %c7 = arith.constant 7 : index
    %121 = memref.load %arg2[%120, %c7] : memref<2x24xf32, #tpu.memory_space<smem>>
    %122 = vector.broadcast %121 : f32 to vector<128xf32>
    %123 = arith.mulf %122, %119 : vector<128xf32>
    %124 = arith.addf %107, %123 : vector<128xf32>
    %125 = arith.index_cast %arg0 : i32 to index
    %c15 = arith.constant 15 : index
    %126 = memref.load %arg2[%125, %c15] : memref<2x24xf32, #tpu.memory_space<smem>>
    %127 = vector.broadcast %126 : f32 to vector<128xf32>
    %128 = arith.mulf %127, %119 : vector<128xf32>
    %129 = arith.addf %112, %128 : vector<128xf32>
    %130 = arith.index_cast %arg0 : i32 to index
    %c23 = arith.constant 23 : index
    %131 = memref.load %arg2[%130, %c23] : memref<2x24xf32, #tpu.memory_space<smem>>
    %132 = vector.broadcast %131 : f32 to vector<128xf32>
    %133 = arith.mulf %132, %119 : vector<128xf32>
    %134 = arith.addf %117, %133 : vector<128xf32>
    %135 = vector.shape_cast %124 : vector<128xf32> to vector<1x128xf32>
    %136 = vector.shape_cast %129 : vector<128xf32> to vector<1x128xf32>
    %137 = vector.shape_cast %134 : vector<128xf32> to vector<1x128xf32>
    %138 = tpu.concatenate %135, %136, %137 in 0 : vector<1x128xf32>, vector<1x128xf32>, vector<1x128xf32> -> vector<3x128xf32>
    %c0_3 = arith.constant 0 : index
    %c0_4 = arith.constant 0 : index
    %c0_5 = arith.constant 0 : index
    %139 = vector.load %arg7[%c0_3, %c0_4, %c0_5] : memref<1x3x128xf32, #tpu.memory_space<vmem>>, vector<1x3x128xf32>
    %140 = vector.shape_cast %139 : vector<1x3x128xf32> to vector<3x128xf32>
    %141 = arith.addf %138, %140 : vector<3x128xf32>
    %c0_6 = arith.constant 0 : index
    %c0_7 = arith.constant 0 : index
    %c0_8 = arith.constant 0 : index
    %c0_9 = arith.constant 0 : index
    %142 = vector.load %arg5[%c0_6, %c0_7, %c0_8, %c0_9] : memref<1x1x8x16xf32, #tpu.memory_space<vmem>>, vector<1x1x8x16xf32>
    %143 = vector.shape_cast %142 : vector<1x1x8x16xf32> to vector<8x16xf32>
    %144 = vector.extract_strided_slice %143 {offsets = [0, 0], sizes = [1, 16], strides = [1, 1]} : vector<8x16xf32> to vector<1x16xf32>
    %145 = vector.shape_cast %144 : vector<1x16xf32> to vector<16xf32>
    %146 = arith.index_cast %arg0 : i32 to index
    %c0_10 = arith.constant 0 : index
    %147 = memref.load %arg2[%146, %c0_10] : memref<2x24xf32, #tpu.memory_space<smem>>
    %148 = vector.broadcast %147 : f32 to vector<16xf32>
    %149 = arith.mulf %148, %145 : vector<16xf32>
    %150 = arith.index_cast %arg0 : i32 to index
    %c8_11 = arith.constant 8 : index
    %151 = memref.load %arg2[%150, %c8_11] : memref<2x24xf32, #tpu.memory_space<smem>>
    %152 = vector.broadcast %151 : f32 to vector<16xf32>
    %153 = arith.mulf %152, %145 : vector<16xf32>
    %154 = arith.index_cast %arg0 : i32 to index
    %c16_12 = arith.constant 16 : index
    %155 = memref.load %arg2[%154, %c16_12] : memref<2x24xf32, #tpu.memory_space<smem>>
    %156 = vector.broadcast %155 : f32 to vector<16xf32>
    %157 = arith.mulf %156, %145 : vector<16xf32>
    %158 = vector.extract_strided_slice %143 {offsets = [1, 0], sizes = [1, 16], strides = [1, 1]} : vector<8x16xf32> to vector<1x16xf32>
    %159 = vector.shape_cast %158 : vector<1x16xf32> to vector<16xf32>
    %160 = arith.index_cast %arg0 : i32 to index
    %c1_13 = arith.constant 1 : index
    %161 = memref.load %arg2[%160, %c1_13] : memref<2x24xf32, #tpu.memory_space<smem>>
    %162 = vector.broadcast %161 : f32 to vector<16xf32>
    %163 = arith.mulf %162, %159 : vector<16xf32>
    %164 = arith.addf %149, %163 : vector<16xf32>
    %165 = arith.index_cast %arg0 : i32 to index
    %c9_14 = arith.constant 9 : index
    %166 = memref.load %arg2[%165, %c9_14] : memref<2x24xf32, #tpu.memory_space<smem>>
    %167 = vector.broadcast %166 : f32 to vector<16xf32>
    %168 = arith.mulf %167, %159 : vector<16xf32>
    %169 = arith.addf %153, %168 : vector<16xf32>
    %170 = arith.index_cast %arg0 : i32 to index
    %c17_15 = arith.constant 17 : index
    %171 = memref.load %arg2[%170, %c17_15] : memref<2x24xf32, #tpu.memory_space<smem>>
    %172 = vector.broadcast %171 : f32 to vector<16xf32>
    %173 = arith.mulf %172, %159 : vector<16xf32>
    %174 = arith.addf %157, %173 : vector<16xf32>
    %175 = vector.extract_strided_slice %143 {offsets = [2, 0], sizes = [1, 16], strides = [1, 1]} : vector<8x16xf32> to vector<1x16xf32>
    %176 = vector.shape_cast %175 : vector<1x16xf32> to vector<16xf32>
    %177 = arith.index_cast %arg0 : i32 to index
    %c2_16 = arith.constant 2 : index
    %178 = memref.load %arg2[%177, %c2_16] : memref<2x24xf32, #tpu.memory_space<smem>>
    %179 = vector.broadcast %178 : f32 to vector<16xf32>
    %180 = arith.mulf %179, %176 : vector<16xf32>
    %181 = arith.addf %164, %180 : vector<16xf32>
    %182 = arith.index_cast %arg0 : i32 to index
    %c10_17 = arith.constant 10 : index
    %183 = memref.load %arg2[%182, %c10_17] : memref<2x24xf32, #tpu.memory_space<smem>>
    %184 = vector.broadcast %183 : f32 to vector<16xf32>
    %185 = arith.mulf %184, %176 : vector<16xf32>
    %186 = arith.addf %169, %185 : vector<16xf32>
    %187 = arith.index_cast %arg0 : i32 to index
    %c18_18 = arith.constant 18 : index
    %188 = memref.load %arg2[%187, %c18_18] : memref<2x24xf32, #tpu.memory_space<smem>>
    %189 = vector.broadcast %188 : f32 to vector<16xf32>
    %190 = arith.mulf %189, %176 : vector<16xf32>
    %191 = arith.addf %174, %190 : vector<16xf32>
    %192 = vector.extract_strided_slice %143 {offsets = [3, 0], sizes = [1, 16], strides = [1, 1]} : vector<8x16xf32> to vector<1x16xf32>
    %193 = vector.shape_cast %192 : vector<1x16xf32> to vector<16xf32>
    %194 = arith.index_cast %arg0 : i32 to index
    %c3_19 = arith.constant 3 : index
    %195 = memref.load %arg2[%194, %c3_19] : memref<2x24xf32, #tpu.memory_space<smem>>
    %196 = vector.broadcast %195 : f32 to vector<16xf32>
    %197 = arith.mulf %196, %193 : vector<16xf32>
    %198 = arith.addf %181, %197 : vector<16xf32>
    %199 = arith.index_cast %arg0 : i32 to index
    %c11_20 = arith.constant 11 : index
    %200 = memref.load %arg2[%199, %c11_20] : memref<2x24xf32, #tpu.memory_space<smem>>
    %201 = vector.broadcast %200 : f32 to vector<16xf32>
    %202 = arith.mulf %201, %193 : vector<16xf32>
    %203 = arith.addf %186, %202 : vector<16xf32>
    %204 = arith.index_cast %arg0 : i32 to index
    %c19_21 = arith.constant 19 : index
    %205 = memref.load %arg2[%204, %c19_21] : memref<2x24xf32, #tpu.memory_space<smem>>
    %206 = vector.broadcast %205 : f32 to vector<16xf32>
    %207 = arith.mulf %206, %193 : vector<16xf32>
    %208 = arith.addf %191, %207 : vector<16xf32>
    %209 = vector.extract_strided_slice %143 {offsets = [4, 0], sizes = [1, 16], strides = [1, 1]} : vector<8x16xf32> to vector<1x16xf32>
    %210 = vector.shape_cast %209 : vector<1x16xf32> to vector<16xf32>
    %211 = arith.index_cast %arg0 : i32 to index
    %c4_22 = arith.constant 4 : index
    %212 = memref.load %arg2[%211, %c4_22] : memref<2x24xf32, #tpu.memory_space<smem>>
    %213 = vector.broadcast %212 : f32 to vector<16xf32>
    %214 = arith.mulf %213, %210 : vector<16xf32>
    %215 = arith.addf %198, %214 : vector<16xf32>
    %216 = arith.index_cast %arg0 : i32 to index
    %c12_23 = arith.constant 12 : index
    %217 = memref.load %arg2[%216, %c12_23] : memref<2x24xf32, #tpu.memory_space<smem>>
    %218 = vector.broadcast %217 : f32 to vector<16xf32>
    %219 = arith.mulf %218, %210 : vector<16xf32>
    %220 = arith.addf %203, %219 : vector<16xf32>
    %221 = arith.index_cast %arg0 : i32 to index
    %c20_24 = arith.constant 20 : index
    %222 = memref.load %arg2[%221, %c20_24] : memref<2x24xf32, #tpu.memory_space<smem>>
    %223 = vector.broadcast %222 : f32 to vector<16xf32>
    %224 = arith.mulf %223, %210 : vector<16xf32>
    %225 = arith.addf %208, %224 : vector<16xf32>
    %226 = vector.extract_strided_slice %143 {offsets = [5, 0], sizes = [1, 16], strides = [1, 1]} : vector<8x16xf32> to vector<1x16xf32>
    %227 = vector.shape_cast %226 : vector<1x16xf32> to vector<16xf32>
    %228 = arith.index_cast %arg0 : i32 to index
    %c5_25 = arith.constant 5 : index
    %229 = memref.load %arg2[%228, %c5_25] : memref<2x24xf32, #tpu.memory_space<smem>>
    %230 = vector.broadcast %229 : f32 to vector<16xf32>
    %231 = arith.mulf %230, %227 : vector<16xf32>
    %232 = arith.addf %215, %231 : vector<16xf32>
    %233 = arith.index_cast %arg0 : i32 to index
    %c13_26 = arith.constant 13 : index
    %234 = memref.load %arg2[%233, %c13_26] : memref<2x24xf32, #tpu.memory_space<smem>>
    %235 = vector.broadcast %234 : f32 to vector<16xf32>
    %236 = arith.mulf %235, %227 : vector<16xf32>
    %237 = arith.addf %220, %236 : vector<16xf32>
    %238 = arith.index_cast %arg0 : i32 to index
    %c21_27 = arith.constant 21 : index
    %239 = memref.load %arg2[%238, %c21_27] : memref<2x24xf32, #tpu.memory_space<smem>>
    %240 = vector.broadcast %239 : f32 to vector<16xf32>
    %241 = arith.mulf %240, %227 : vector<16xf32>
    %242 = arith.addf %225, %241 : vector<16xf32>
    %243 = vector.extract_strided_slice %143 {offsets = [6, 0], sizes = [1, 16], strides = [1, 1]} : vector<8x16xf32> to vector<1x16xf32>
    %244 = vector.shape_cast %243 : vector<1x16xf32> to vector<16xf32>
    %245 = arith.index_cast %arg0 : i32 to index
    %c6_28 = arith.constant 6 : index
    %246 = memref.load %arg2[%245, %c6_28] : memref<2x24xf32, #tpu.memory_space<smem>>
    %247 = vector.broadcast %246 : f32 to vector<16xf32>
    %248 = arith.mulf %247, %244 : vector<16xf32>
    %249 = arith.addf %232, %248 : vector<16xf32>
    %250 = arith.index_cast %arg0 : i32 to index
    %c14_29 = arith.constant 14 : index
    %251 = memref.load %arg2[%250, %c14_29] : memref<2x24xf32, #tpu.memory_space<smem>>
    %252 = vector.broadcast %251 : f32 to vector<16xf32>
    %253 = arith.mulf %252, %244 : vector<16xf32>
    %254 = arith.addf %237, %253 : vector<16xf32>
    %255 = arith.index_cast %arg0 : i32 to index
    %c22_30 = arith.constant 22 : index
    %256 = memref.load %arg2[%255, %c22_30] : memref<2x24xf32, #tpu.memory_space<smem>>
    %257 = vector.broadcast %256 : f32 to vector<16xf32>
    %258 = arith.mulf %257, %244 : vector<16xf32>
    %259 = arith.addf %242, %258 : vector<16xf32>
    %260 = vector.extract_strided_slice %143 {offsets = [7, 0], sizes = [1, 16], strides = [1, 1]} : vector<8x16xf32> to vector<1x16xf32>
    %261 = vector.shape_cast %260 : vector<1x16xf32> to vector<16xf32>
    %262 = arith.index_cast %arg0 : i32 to index
    %c7_31 = arith.constant 7 : index
    %263 = memref.load %arg2[%262, %c7_31] : memref<2x24xf32, #tpu.memory_space<smem>>
    %264 = vector.broadcast %263 : f32 to vector<16xf32>
    %265 = arith.mulf %264, %261 : vector<16xf32>
    %266 = arith.addf %249, %265 : vector<16xf32>
    %267 = arith.index_cast %arg0 : i32 to index
    %c15_32 = arith.constant 15 : index
    %268 = memref.load %arg2[%267, %c15_32] : memref<2x24xf32, #tpu.memory_space<smem>>
    %269 = vector.broadcast %268 : f32 to vector<16xf32>
    %270 = arith.mulf %269, %261 : vector<16xf32>
    %271 = arith.addf %254, %270 : vector<16xf32>
    %272 = arith.index_cast %arg0 : i32 to index
    %c23_33 = arith.constant 23 : index
    %273 = memref.load %arg2[%272, %c23_33] : memref<2x24xf32, #tpu.memory_space<smem>>
    %274 = vector.broadcast %273 : f32 to vector<16xf32>
    %275 = arith.mulf %274, %261 : vector<16xf32>
    %276 = arith.addf %259, %275 : vector<16xf32>
    %277 = vector.shape_cast %266 : vector<16xf32> to vector<1x16xf32>
    %278 = vector.shape_cast %271 : vector<16xf32> to vector<1x16xf32>
    %279 = vector.shape_cast %276 : vector<16xf32> to vector<1x16xf32>
    %280 = tpu.concatenate %277, %278, %279 in 0 : vector<1x16xf32>, vector<1x16xf32>, vector<1x16xf32> -> vector<3x16xf32>
    %c0_34 = arith.constant 0 : index
    %c0_35 = arith.constant 0 : index
    %c0_36 = arith.constant 0 : index
    %c0_37 = arith.constant 0 : index
    %281 = vector.load %arg6[%c0_34, %c0_35, %c0_36, %c0_37] : memref<1x1x8x16xf32, #tpu.memory_space<vmem>>, vector<1x1x8x16xf32>
    %282 = vector.shape_cast %281 : vector<1x1x8x16xf32> to vector<8x16xf32>
    %283 = vector.extract_strided_slice %282 {offsets = [0, 0], sizes = [1, 16], strides = [1, 1]} : vector<8x16xf32> to vector<1x16xf32>
    %284 = vector.shape_cast %283 : vector<1x16xf32> to vector<16xf32>
    %285 = arith.index_cast %arg0 : i32 to index
    %c0_38 = arith.constant 0 : index
    %286 = memref.load %arg2[%285, %c0_38] : memref<2x24xf32, #tpu.memory_space<smem>>
    %287 = vector.broadcast %286 : f32 to vector<16xf32>
    %288 = arith.mulf %287, %284 : vector<16xf32>
    %289 = arith.index_cast %arg0 : i32 to index
    %c8_39 = arith.constant 8 : index
    %290 = memref.load %arg2[%289, %c8_39] : memref<2x24xf32, #tpu.memory_space<smem>>
    %291 = vector.broadcast %290 : f32 to vector<16xf32>
    %292 = arith.mulf %291, %284 : vector<16xf32>
    %293 = arith.index_cast %arg0 : i32 to index
    %c16_40 = arith.constant 16 : index
    %294 = memref.load %arg2[%293, %c16_40] : memref<2x24xf32, #tpu.memory_space<smem>>
    %295 = vector.broadcast %294 : f32 to vector<16xf32>
    %296 = arith.mulf %295, %284 : vector<16xf32>
    %297 = vector.extract_strided_slice %282 {offsets = [1, 0], sizes = [1, 16], strides = [1, 1]} : vector<8x16xf32> to vector<1x16xf32>
    %298 = vector.shape_cast %297 : vector<1x16xf32> to vector<16xf32>
    %299 = arith.index_cast %arg0 : i32 to index
    %c1_41 = arith.constant 1 : index
    %300 = memref.load %arg2[%299, %c1_41] : memref<2x24xf32, #tpu.memory_space<smem>>
    %301 = vector.broadcast %300 : f32 to vector<16xf32>
    %302 = arith.mulf %301, %298 : vector<16xf32>
    %303 = arith.addf %288, %302 : vector<16xf32>
    %304 = arith.index_cast %arg0 : i32 to index
    %c9_42 = arith.constant 9 : index
    %305 = memref.load %arg2[%304, %c9_42] : memref<2x24xf32, #tpu.memory_space<smem>>
    %306 = vector.broadcast %305 : f32 to vector<16xf32>
    %307 = arith.mulf %306, %298 : vector<16xf32>
    %308 = arith.addf %292, %307 : vector<16xf32>
    %309 = arith.index_cast %arg0 : i32 to index
    %c17_43 = arith.constant 17 : index
    %310 = memref.load %arg2[%309, %c17_43] : memref<2x24xf32, #tpu.memory_space<smem>>
    %311 = vector.broadcast %310 : f32 to vector<16xf32>
    %312 = arith.mulf %311, %298 : vector<16xf32>
    %313 = arith.addf %296, %312 : vector<16xf32>
    %314 = vector.extract_strided_slice %282 {offsets = [2, 0], sizes = [1, 16], strides = [1, 1]} : vector<8x16xf32> to vector<1x16xf32>
    %315 = vector.shape_cast %314 : vector<1x16xf32> to vector<16xf32>
    %316 = arith.index_cast %arg0 : i32 to index
    %c2_44 = arith.constant 2 : index
    %317 = memref.load %arg2[%316, %c2_44] : memref<2x24xf32, #tpu.memory_space<smem>>
    %318 = vector.broadcast %317 : f32 to vector<16xf32>
    %319 = arith.mulf %318, %315 : vector<16xf32>
    %320 = arith.addf %303, %319 : vector<16xf32>
    %321 = arith.index_cast %arg0 : i32 to index
    %c10_45 = arith.constant 10 : index
    %322 = memref.load %arg2[%321, %c10_45] : memref<2x24xf32, #tpu.memory_space<smem>>
    %323 = vector.broadcast %322 : f32 to vector<16xf32>
    %324 = arith.mulf %323, %315 : vector<16xf32>
    %325 = arith.addf %308, %324 : vector<16xf32>
    %326 = arith.index_cast %arg0 : i32 to index
    %c18_46 = arith.constant 18 : index
    %327 = memref.load %arg2[%326, %c18_46] : memref<2x24xf32, #tpu.memory_space<smem>>
    %328 = vector.broadcast %327 : f32 to vector<16xf32>
    %329 = arith.mulf %328, %315 : vector<16xf32>
    %330 = arith.addf %313, %329 : vector<16xf32>
    %331 = vector.extract_strided_slice %282 {offsets = [3, 0], sizes = [1, 16], strides = [1, 1]} : vector<8x16xf32> to vector<1x16xf32>
    %332 = vector.shape_cast %331 : vector<1x16xf32> to vector<16xf32>
    %333 = arith.index_cast %arg0 : i32 to index
    %c3_47 = arith.constant 3 : index
    %334 = memref.load %arg2[%333, %c3_47] : memref<2x24xf32, #tpu.memory_space<smem>>
    %335 = vector.broadcast %334 : f32 to vector<16xf32>
    %336 = arith.mulf %335, %332 : vector<16xf32>
    %337 = arith.addf %320, %336 : vector<16xf32>
    %338 = arith.index_cast %arg0 : i32 to index
    %c11_48 = arith.constant 11 : index
    %339 = memref.load %arg2[%338, %c11_48] : memref<2x24xf32, #tpu.memory_space<smem>>
    %340 = vector.broadcast %339 : f32 to vector<16xf32>
    %341 = arith.mulf %340, %332 : vector<16xf32>
    %342 = arith.addf %325, %341 : vector<16xf32>
    %343 = arith.index_cast %arg0 : i32 to index
    %c19_49 = arith.constant 19 : index
    %344 = memref.load %arg2[%343, %c19_49] : memref<2x24xf32, #tpu.memory_space<smem>>
    %345 = vector.broadcast %344 : f32 to vector<16xf32>
    %346 = arith.mulf %345, %332 : vector<16xf32>
    %347 = arith.addf %330, %346 : vector<16xf32>
    %348 = vector.extract_strided_slice %282 {offsets = [4, 0], sizes = [1, 16], strides = [1, 1]} : vector<8x16xf32> to vector<1x16xf32>
    %349 = vector.shape_cast %348 : vector<1x16xf32> to vector<16xf32>
    %350 = arith.index_cast %arg0 : i32 to index
    %c4_50 = arith.constant 4 : index
    %351 = memref.load %arg2[%350, %c4_50] : memref<2x24xf32, #tpu.memory_space<smem>>
    %352 = vector.broadcast %351 : f32 to vector<16xf32>
    %353 = arith.mulf %352, %349 : vector<16xf32>
    %354 = arith.addf %337, %353 : vector<16xf32>
    %355 = arith.index_cast %arg0 : i32 to index
    %c12_51 = arith.constant 12 : index
    %356 = memref.load %arg2[%355, %c12_51] : memref<2x24xf32, #tpu.memory_space<smem>>
    %357 = vector.broadcast %356 : f32 to vector<16xf32>
    %358 = arith.mulf %357, %349 : vector<16xf32>
    %359 = arith.addf %342, %358 : vector<16xf32>
    %360 = arith.index_cast %arg0 : i32 to index
    %c20_52 = arith.constant 20 : index
    %361 = memref.load %arg2[%360, %c20_52] : memref<2x24xf32, #tpu.memory_space<smem>>
    %362 = vector.broadcast %361 : f32 to vector<16xf32>
    %363 = arith.mulf %362, %349 : vector<16xf32>
    %364 = arith.addf %347, %363 : vector<16xf32>
    %365 = vector.extract_strided_slice %282 {offsets = [5, 0], sizes = [1, 16], strides = [1, 1]} : vector<8x16xf32> to vector<1x16xf32>
    %366 = vector.shape_cast %365 : vector<1x16xf32> to vector<16xf32>
    %367 = arith.index_cast %arg0 : i32 to index
    %c5_53 = arith.constant 5 : index
    %368 = memref.load %arg2[%367, %c5_53] : memref<2x24xf32, #tpu.memory_space<smem>>
    %369 = vector.broadcast %368 : f32 to vector<16xf32>
    %370 = arith.mulf %369, %366 : vector<16xf32>
    %371 = arith.addf %354, %370 : vector<16xf32>
    %372 = arith.index_cast %arg0 : i32 to index
    %c13_54 = arith.constant 13 : index
    %373 = memref.load %arg2[%372, %c13_54] : memref<2x24xf32, #tpu.memory_space<smem>>
    %374 = vector.broadcast %373 : f32 to vector<16xf32>
    %375 = arith.mulf %374, %366 : vector<16xf32>
    %376 = arith.addf %359, %375 : vector<16xf32>
    %377 = arith.index_cast %arg0 : i32 to index
    %c21_55 = arith.constant 21 : index
    %378 = memref.load %arg2[%377, %c21_55] : memref<2x24xf32, #tpu.memory_space<smem>>
    %379 = vector.broadcast %378 : f32 to vector<16xf32>
    %380 = arith.mulf %379, %366 : vector<16xf32>
    %381 = arith.addf %364, %380 : vector<16xf32>
    %382 = vector.extract_strided_slice %282 {offsets = [6, 0], sizes = [1, 16], strides = [1, 1]} : vector<8x16xf32> to vector<1x16xf32>
    %383 = vector.shape_cast %382 : vector<1x16xf32> to vector<16xf32>
    %384 = arith.index_cast %arg0 : i32 to index
    %c6_56 = arith.constant 6 : index
    %385 = memref.load %arg2[%384, %c6_56] : memref<2x24xf32, #tpu.memory_space<smem>>
    %386 = vector.broadcast %385 : f32 to vector<16xf32>
    %387 = arith.mulf %386, %383 : vector<16xf32>
    %388 = arith.addf %371, %387 : vector<16xf32>
    %389 = arith.index_cast %arg0 : i32 to index
    %c14_57 = arith.constant 14 : index
    %390 = memref.load %arg2[%389, %c14_57] : memref<2x24xf32, #tpu.memory_space<smem>>
    %391 = vector.broadcast %390 : f32 to vector<16xf32>
    %392 = arith.mulf %391, %383 : vector<16xf32>
    %393 = arith.addf %376, %392 : vector<16xf32>
    %394 = arith.index_cast %arg0 : i32 to index
    %c22_58 = arith.constant 22 : index
    %395 = memref.load %arg2[%394, %c22_58] : memref<2x24xf32, #tpu.memory_space<smem>>
    %396 = vector.broadcast %395 : f32 to vector<16xf32>
    %397 = arith.mulf %396, %383 : vector<16xf32>
    %398 = arith.addf %381, %397 : vector<16xf32>
    %399 = vector.extract_strided_slice %282 {offsets = [7, 0], sizes = [1, 16], strides = [1, 1]} : vector<8x16xf32> to vector<1x16xf32>
    %400 = vector.shape_cast %399 : vector<1x16xf32> to vector<16xf32>
    %401 = arith.index_cast %arg0 : i32 to index
    %c7_59 = arith.constant 7 : index
    %402 = memref.load %arg2[%401, %c7_59] : memref<2x24xf32, #tpu.memory_space<smem>>
    %403 = vector.broadcast %402 : f32 to vector<16xf32>
    %404 = arith.mulf %403, %400 : vector<16xf32>
    %405 = arith.addf %388, %404 : vector<16xf32>
    %406 = arith.index_cast %arg0 : i32 to index
    %c15_60 = arith.constant 15 : index
    %407 = memref.load %arg2[%406, %c15_60] : memref<2x24xf32, #tpu.memory_space<smem>>
    %408 = vector.broadcast %407 : f32 to vector<16xf32>
    %409 = arith.mulf %408, %400 : vector<16xf32>
    %410 = arith.addf %393, %409 : vector<16xf32>
    %411 = arith.index_cast %arg0 : i32 to index
    %c23_61 = arith.constant 23 : index
    %412 = memref.load %arg2[%411, %c23_61] : memref<2x24xf32, #tpu.memory_space<smem>>
    %413 = vector.broadcast %412 : f32 to vector<16xf32>
    %414 = arith.mulf %413, %400 : vector<16xf32>
    %415 = arith.addf %398, %414 : vector<16xf32>
    %416 = vector.shape_cast %405 : vector<16xf32> to vector<1x16xf32>
    %417 = vector.shape_cast %410 : vector<16xf32> to vector<1x16xf32>
    %418 = vector.shape_cast %415 : vector<16xf32> to vector<1x16xf32>
    %419 = tpu.concatenate %416, %417, %418 in 0 : vector<1x16xf32>, vector<1x16xf32>, vector<1x16xf32> -> vector<3x16xf32>
    %c0_62 = arith.constant 0 : index
    %c0_63 = arith.constant 0 : index
    %c0_64 = arith.constant 0 : index
    %c0_65 = arith.constant 0 : index
    %420 = vector.load %arg8[%c0_62, %c0_63, %c0_64, %c0_65] : memref<1x1x3x16xf32, #tpu.memory_space<vmem>>, vector<1x1x3x16xf32>
    %421 = vector.shape_cast %420 : vector<1x1x3x16xf32> to vector<3x16xf32>
    %422 = arith.addf %280, %421 : vector<3x16xf32>
    %c0_66 = arith.constant 0 : index
    %c0_67 = arith.constant 0 : index
    %c0_68 = arith.constant 0 : index
    %c0_69 = arith.constant 0 : index
    %423 = vector.load %arg9[%c0_66, %c0_67, %c0_68, %c0_69] : memref<1x1x3x16xf32, #tpu.memory_space<vmem>>, vector<1x1x3x16xf32>
    %424 = vector.shape_cast %423 : vector<1x1x3x16xf32> to vector<3x16xf32>
    %425 = arith.addf %419, %424 : vector<3x16xf32>
    %426 = vector.extract_strided_slice %141 {offsets = [0, 0], sizes = [3, 16], strides = [1, 1]} : vector<3x128xf32> to vector<3x16xf32>
    %427 = vector.extract_strided_slice %141 {offsets = [0, 16], sizes = [3, 16], strides = [1, 1]} : vector<3x128xf32> to vector<3x16xf32>
    %428 = vector.extract_strided_slice %141 {offsets = [0, 32], sizes = [3, 16], strides = [1, 1]} : vector<3x128xf32> to vector<3x16xf32>
    %429 = vector.extract_strided_slice %141 {offsets = [0, 48], sizes = [3, 16], strides = [1, 1]} : vector<3x128xf32> to vector<3x16xf32>
    %430 = vector.extract_strided_slice %141 {offsets = [0, 64], sizes = [3, 16], strides = [1, 1]} : vector<3x128xf32> to vector<3x16xf32>
    %431 = vector.extract_strided_slice %141 {offsets = [0, 80], sizes = [3, 16], strides = [1, 1]} : vector<3x128xf32> to vector<3x16xf32>
    %432 = vector.extract_strided_slice %141 {offsets = [0, 96], sizes = [3, 16], strides = [1, 1]} : vector<3x128xf32> to vector<3x16xf32>
    %433 = vector.extract_strided_slice %141 {offsets = [0, 112], sizes = [3, 16], strides = [1, 1]} : vector<3x128xf32> to vector<3x16xf32>
    %434 = vector.shape_cast %426 : vector<3x16xf32> to vector<3x1x16xf32>
    %435 = vector.shape_cast %427 : vector<3x16xf32> to vector<3x1x16xf32>
    %436 = vector.shape_cast %428 : vector<3x16xf32> to vector<3x1x16xf32>
    %437 = vector.shape_cast %429 : vector<3x16xf32> to vector<3x1x16xf32>
    %438 = vector.shape_cast %430 : vector<3x16xf32> to vector<3x1x16xf32>
    %439 = vector.shape_cast %431 : vector<3x16xf32> to vector<3x1x16xf32>
    %440 = vector.shape_cast %432 : vector<3x16xf32> to vector<3x1x16xf32>
    %441 = vector.shape_cast %433 : vector<3x16xf32> to vector<3x1x16xf32>
    %442 = tpu.concatenate %434, %435, %436, %437, %438, %439, %440, %441 in 1 : vector<3x1x16xf32>, vector<3x1x16xf32>, vector<3x1x16xf32>, vector<3x1x16xf32>, vector<3x1x16xf32>, vector<3x1x16xf32>, vector<3x1x16xf32>, vector<3x1x16xf32> -> vector<3x8x16xf32>
    %443 = vector.shape_cast %422 : vector<3x16xf32> to vector<3x1x16xf32>
    %444 = vector.extract_strided_slice %442 {offsets = [0, 0, 0], sizes = [3, 7, 16], strides = [1, 1, 1]} : vector<3x8x16xf32> to vector<3x7x16xf32>
    %445 = tpu.concatenate %443, %444 in 1 : vector<3x1x16xf32>, vector<3x7x16xf32> -> vector<3x8x16xf32>
    %446 = vector.extract_strided_slice %442 {offsets = [0, 1, 0], sizes = [3, 7, 16], strides = [1, 1, 1]} : vector<3x8x16xf32> to vector<3x7x16xf32>
    %447 = vector.shape_cast %425 : vector<3x16xf32> to vector<3x1x16xf32>
    %448 = tpu.concatenate %446, %447 in 1 : vector<3x7x16xf32>, vector<3x1x16xf32> -> vector<3x8x16xf32>
    %cst = arith.constant 2.500000e-01 : f32
    %449 = vector.broadcast %cst : f32 to vector<3x8x16xf32>
    %450 = arith.mulf %449, %445 : vector<3x8x16xf32>
    %cst_70 = arith.constant 7.500000e-01 : f32
    %451 = vector.broadcast %cst_70 : f32 to vector<3x8x16xf32>
    %452 = arith.mulf %451, %442 : vector<3x8x16xf32>
    %453 = arith.addf %450, %452 : vector<3x8x16xf32>
    %cst_71 = arith.constant 7.500000e-01 : f32
    %454 = vector.broadcast %cst_71 : f32 to vector<3x8x16xf32>
    %455 = arith.mulf %454, %442 : vector<3x8x16xf32>
    %cst_72 = arith.constant 2.500000e-01 : f32
    %456 = vector.broadcast %cst_72 : f32 to vector<3x8x16xf32>
    %457 = arith.mulf %456, %448 : vector<3x8x16xf32>
    %458 = arith.addf %455, %457 : vector<3x8x16xf32>
    %459 = vector.extract_strided_slice %453 {offsets = [0, 0, 0], sizes = [3, 1, 16], strides = [1, 1, 1]} : vector<3x8x16xf32> to vector<3x1x16xf32>
    %460 = vector.extract_strided_slice %458 {offsets = [0, 0, 0], sizes = [3, 1, 16], strides = [1, 1, 1]} : vector<3x8x16xf32> to vector<3x1x16xf32>
    %461 = vector.extract_strided_slice %453 {offsets = [0, 1, 0], sizes = [3, 1, 16], strides = [1, 1, 1]} : vector<3x8x16xf32> to vector<3x1x16xf32>
    %462 = vector.extract_strided_slice %458 {offsets = [0, 1, 0], sizes = [3, 1, 16], strides = [1, 1, 1]} : vector<3x8x16xf32> to vector<3x1x16xf32>
    %463 = vector.extract_strided_slice %453 {offsets = [0, 2, 0], sizes = [3, 1, 16], strides = [1, 1, 1]} : vector<3x8x16xf32> to vector<3x1x16xf32>
    %464 = vector.extract_strided_slice %458 {offsets = [0, 2, 0], sizes = [3, 1, 16], strides = [1, 1, 1]} : vector<3x8x16xf32> to vector<3x1x16xf32>
    %465 = vector.extract_strided_slice %453 {offsets = [0, 3, 0], sizes = [3, 1, 16], strides = [1, 1, 1]} : vector<3x8x16xf32> to vector<3x1x16xf32>
    %466 = vector.extract_strided_slice %458 {offsets = [0, 3, 0], sizes = [3, 1, 16], strides = [1, 1, 1]} : vector<3x8x16xf32> to vector<3x1x16xf32>
    %467 = vector.extract_strided_slice %453 {offsets = [0, 4, 0], sizes = [3, 1, 16], strides = [1, 1, 1]} : vector<3x8x16xf32> to vector<3x1x16xf32>
    %468 = vector.extract_strided_slice %458 {offsets = [0, 4, 0], sizes = [3, 1, 16], strides = [1, 1, 1]} : vector<3x8x16xf32> to vector<3x1x16xf32>
    %469 = vector.extract_strided_slice %453 {offsets = [0, 5, 0], sizes = [3, 1, 16], strides = [1, 1, 1]} : vector<3x8x16xf32> to vector<3x1x16xf32>
    %470 = vector.extract_strided_slice %458 {offsets = [0, 5, 0], sizes = [3, 1, 16], strides = [1, 1, 1]} : vector<3x8x16xf32> to vector<3x1x16xf32>
    %471 = vector.extract_strided_slice %453 {offsets = [0, 6, 0], sizes = [3, 1, 16], strides = [1, 1, 1]} : vector<3x8x16xf32> to vector<3x1x16xf32>
    %472 = vector.extract_strided_slice %458 {offsets = [0, 6, 0], sizes = [3, 1, 16], strides = [1, 1, 1]} : vector<3x8x16xf32> to vector<3x1x16xf32>
    %473 = vector.extract_strided_slice %453 {offsets = [0, 7, 0], sizes = [3, 1, 16], strides = [1, 1, 1]} : vector<3x8x16xf32> to vector<3x1x16xf32>
    %474 = vector.extract_strided_slice %458 {offsets = [0, 7, 0], sizes = [3, 1, 16], strides = [1, 1, 1]} : vector<3x8x16xf32> to vector<3x1x16xf32>
    %475 = tpu.concatenate %459, %460, %461, %462, %463, %464, %465, %466, %467, %468, %469, %470, %471, %472, %473, %474 in 1 : vector<3x1x16xf32>, vector<3x1x16xf32>, vector<3x1x16xf32>, vector<3x1x16xf32>, vector<3x1x16xf32>, vector<3x1x16xf32>, vector<3x1x16xf32>, vector<3x1x16xf32>, vector<3x1x16xf32>, vector<3x1x16xf32>, vector<3x1x16xf32>, vector<3x1x16xf32>, vector<3x1x16xf32>, vector<3x1x16xf32>, vector<3x1x16xf32>, vector<3x1x16xf32> -> vector<3x16x16xf32>
    %c0_73 = arith.constant 0 : index
    %c0_74 = arith.constant 0 : index
    %476 = vector.load %arg3[%c0_73, %c0_74] : memref<16x32xbf16, #tpu.memory_space<vmem>>, vector<16x32xbf16>
    %477 = arith.extf %476 : vector<16x32xbf16> to vector<16x32xf32>
    %478 = vector.shape_cast %475 : vector<3x16x16xf32> to vector<48x16xf32>
    %cst_75 = arith.constant dense<0.000000e+00> : vector<48x32xf32>
    %479 = tpu.matmul %478, %477, %cst_75 {dimension_numbers = #tpu.dot_dimension_numbers<[1], [0], [0], [1], [0, 0, 1, 1], [], []>} : vector<48x16xf32>, vector<16x32xf32>, vector<48x32xf32> -> vector<48x32xf32>
    %480 = vector.shape_cast %479 : vector<48x32xf32> to vector<3x16x32xf32>
    %c0_76 = arith.constant 0 : index
    %c0_77 = arith.constant 0 : index
    %c0_78 = arith.constant 0 : index
    %c0_79 = arith.constant 0 : index
    %481 = vector.load %arg10[%c0_76, %c0_77, %c0_78, %c0_79] : memref<1x3x16x32xf32, #tpu.memory_space<vmem>>, vector<1x3x16x32xf32>
    %482 = vector.shape_cast %481 : vector<1x3x16x32xf32> to vector<3x16x32xf32>
    %483 = vector.shape_cast %480 : vector<3x16x32xf32> to vector<1x3x16x32xf32>
    tpu.vector_store %arg10[%c0_76, %c0_77, %c0_78, %c0_79], %483 {strides = array<i32>} : memref<1x3x16x32xf32, #tpu.memory_space<vmem>>, vector<1x3x16x32xf32>,
    return
  }
  func.func @transform_0(%arg0: i32, %arg1: i32) -> (i32, i32) {
    %c0_i32 = arith.constant 0 : i32
    %c0_i32_0 = arith.constant 0 : i32
    %c0_i32_1 = arith.constant 0 : i32
    return %c0_i32, %c0_i32_0 : i32, i32
  }
  func.func @transform_1(%arg0: i32, %arg1: i32) -> (i32, i32) {
    %c0_i32 = arith.constant 0 : i32
    %c0_i32_0 = arith.constant 0 : i32
    %c0_i32_1 = arith.constant 0 : i32
    return %c0_i32, %c0_i32_0 : i32, i32
  }
  func.func @transform_2(%arg0: i32, %arg1: i32) -> (i32, i32, i32) {
    %c0_i32 = arith.constant 0 : i32
    %c0_i32_0 = arith.constant 0 : i32
    return %arg0, %c0_i32, %arg1 : i32, i32, i32
  }
  func.func @transform_3(%arg0: i32, %arg1: i32) -> (i32, i32, i32, i32) {
    %c0_i32 = arith.constant 0 : i32
    %c0_i32_0 = arith.constant 0 : i32
    %c0_i32_1 = arith.constant 0 : i32
    return %arg0, %arg1, %c0_i32, %c0_i32_0 : i32, i32, i32, i32
  }
  func.func @transform_4(%arg0: i32, %arg1: i32) -> (i32, i32, i32, i32) {
    %c0_i32 = arith.constant 0 : i32
    %c0_i32_0 = arith.constant 0 : i32
    %c0_i32_1 = arith.constant 0 : i32
    return %arg0, %arg1, %c0_i32, %c0_i32_0 : i32, i32, i32, i32
  }
  func.func @transform_5(%arg0: i32, %arg1: i32) -> (i32, i32, i32) {
    %c0_i32 = arith.constant 0 : i32
    %c0_i32_0 = arith.constant 0 : i32
    return %arg0, %c0_i32, %arg1 : i32, i32, i32
  }
  func.func @transform_6(%arg0: i32, %arg1: i32) -> (i32, i32, i32, i32) {
    %c0_i32 = arith.constant 0 : i32
    %c0_i32_0 = arith.constant 0 : i32
    %c0_i32_1 = arith.constant 0 : i32
    return %arg0, %arg1, %c0_i32, %c0_i32_0 : i32, i32, i32, i32
  }
  func.func @transform_7(%arg0: i32, %arg1: i32) -> (i32, i32, i32, i32) {
    %c0_i32 = arith.constant 0 : i32
    %c0_i32_0 = arith.constant 0 : i32
    %c0_i32_1 = arith.constant 0 : i32
    return %arg0, %arg1, %c0_i32, %c0_i32_0 : i32, i32, i32, i32
  }
  func.func @transform_8(%arg0: i32, %arg1: i32) -> (i32, i32, i32, i32) {
    %c0_i32 = arith.constant 0 : i32
    %c0_i32_0 = arith.constant 0 : i32
    %c0_i32_1 = arith.constant 0 : i32
    return %arg0, %c0_i32, %arg1, %c0_i32_0 : i32, i32, i32, i32
  }
}

</mosaic_0001>

<llo_original>
// kernel: rgb_block_forward.1
$region0: #{rgb_block_forward.1}
  #allocation0 [shape = 'u32[]', space=smem, size = 0x4, offset = 0x4, fixed_abs, tag = 'smem constant byte address 0x4 - core index']
  #allocation1 [shape = 'u32[144,128]{1,0:T(1,128)}', space=vmem, size = 0x12000, scoped, tag = 'internal scratch']
  #allocation6 [shape = 's32[]', space=sflag, size = 0x4, offset = 0, fixed_abs, tag = 'sflag constant byte address 0x0 - dummy sync flag']
  %s0 = inlined_call_operand.vmem [shape: f32[2,24], index: 0, kind: input, shape index: {}]
  %s1 = inlined_call_operand.vmem [shape: bf16[16,32], index: 1, kind: input, shape index: {}]
  %s2 = inlined_call_operand.vmem [shape: f32[2,8,256], index: 2, kind: input, shape index: {}]
  %s3 = inlined_call_operand.vmem [shape: f32[2,2,8,16], index: 3, kind: input, shape index: {}]
  %s4 = inlined_call_operand.vmem [shape: f32[2,2,8,16], index: 4, kind: input, shape index: {}]
  %s5 = inlined_call_operand.vmem [shape: f32[2,3,256], index: 5, kind: input, shape index: {}]
  %s6 = inlined_call_operand.vmem [shape: f32[2,2,3,16], index: 6, kind: input, shape index: {}]
  %s7 = inlined_call_operand.vmem [shape: f32[2,2,3,16], index: 7, kind: input, shape index: {}]
  %s8 = inlined_call_operand.hbm [shape: f32[2,3,32,32], index: 8, kind: output, shape index: {}]
  %s9 = sld [smem:[#allocation0]]
  $region69: #{rgb_block_forward.1} parent=0
    _
  %s11 = ssub.s32 1, %s9
  %s12 = scalar_select 0, %s11, %s9
  $region1: #{rgb_block_forward.1} parent=0
    #allocation2 [shape = 'u8[1024]{0}', space=smem, size = 0x400, scoped, tag = 'input window, operand 0, single buffered']
    #allocation3 [shape = 's32[2]{0}', space=sflag, size = 0x8, scoped, tag = 'scoped memory for rgb_block_forward.1']
    #allocation4 [shape = 's32[2]{0}', space=sflag, size = 0x8, scoped, tag = 'scoped memory for rgb_block_forward.1']
    #allocation5 [shape = 'u8[49152]{0}', space=vmem, size = 0xc000, scoped, tag = 'output window, operand 0']
    %13 = vsyncpa [#allocation4], 0
    %14 = vsyncpa [#allocation3], 0
    %s15 = scalar_lea.sflag [#allocation3], 1
    %16 = vsyncpa %s15, 0
    loop: start=0, step=1, limit=6
    $region2: #{rgb_block_forward.1} parent=1 // loop_pre_header
      _
    $region3: #{rgb_block_forward.1} parent=1 // loop_header
      %s18 = sphi 0, %s22
      %p19 = scmp.ge.s32.totalorder %s18, 6
      %s25 = sphi 0, %s37
      %s26 = sphi 0, %s33
      %s27 = sphi 0, %s25
      %s28 = sphi 0, %s26
      %s29 = sphi 0, %s27
      %s30 = sphi 0, %s28
      %s38 = sphi 0, %s38
      %s40 = sphi 0, %s38
      %s41 = sphi 0, %s40
      %s55 = sphi 0, %s41
      %s59 = sphi 0, %s59
      %s61 = sphi 0, %s59
      %s62 = sphi 0, %s61
      %s76 = sphi 0, %s62
      %s84 = sphi 0, %s86
      %s87 = sphi 0, %s84
      %s88 = sphi 0, %s87
      %s104 = sphi 0, %s88
      %s112 = sphi 0, %s114
      %s115 = sphi 0, %s112
      %s116 = sphi 0, %s115
      %s132 = sphi 0, %s116
      %s140 = sphi 0, %s142
      %s143 = sphi 0, %s140
      %s144 = sphi 0, %s143
      %s160 = sphi 0, %s144
      %s168 = sphi 0, %s170
      %s171 = sphi 0, %s168
      %s172 = sphi 0, %s171
      %s188 = sphi 0, %s172
      %s196 = sphi 0, %s198
      %s199 = sphi 0, %s196
      %s200 = sphi 0, %s199
      %s216 = sphi 0, %s200
      %s224 = sphi 0, %s226
      %s227 = sphi 0, %s224
      %s228 = sphi 0, %s227
      %s244 = sphi 0, %s228
      %s252 = sphi 0, %s254
      %s255 = sphi 0, %s252
      %s256 = sphi 0, %s255
      %s272 = sphi 0, %s256
    $region4: #{rgb_block_forward.1} parent=1 // loop_header_branch
      %21 = sbr.rel (%p19) target = $region8
    $region5: #{rgb_block_forward.1} parent=1 // loop_body
      %s23 = ssub.s32 %s18, 1
      %s24 = ssub.s32 %s18, 2
      %s31 = sadd.s32 1, %s26
      %p32 = scmp.ge.s32.totalorder %s31, 2
      %s33 = scalar_select %p32, 0, %s31
      %s34 = sadd.s32 1, %s25
      %s35 = scalar_select %p32, %s34, %s25
      %p36 = scmp.ge.s32.totalorder %s35, 2
      %s37 = scalar_select %p36, 0, %s35
      %s39 = sadd.s32 %s38, 1
      %p42 = scmp.eq.s32.totalorder %s18, 3
      %p43 = scmp.ne.s32.totalorder %s38, %s40
      %p44 = scmp.eq.s32.totalorder %s18, 0
      %p45 = por %p43, %p44
      %p46 = scmp.ne.s32.totalorder %s38, %s40
      %p47 = scmp.eq.s32.totalorder %s23, 3
      %p48 = por %p46, %p47
      %p49 = scmp.ne.s32.totalorder %s40, %s41
      %p50 = scmp.eq.s32.totalorder %s23, 0
      %p51 = por %p49, %p50
      %p52 = scmp.ne.s32.totalorder %s40, %s41
      %p53 = scmp.eq.s32.totalorder %s24, 3
      %p54 = por %p52, %p53
      %p56 = scmp.ne.s32.totalorder %s41, %s55
      %p57 = scmp.eq.s32.totalorder %s24, 0
      %p58 = por %p56, %p57
      %s60 = sadd.s32 %s59, 1
      %p63 = scmp.eq.s32.totalorder %s18, 3
      %p64 = scmp.ne.s32.totalorder %s59, %s61
      %p65 = scmp.eq.s32.totalorder %s18, 0
      %p66 = por %p64, %p65
      %p67 = scmp.ne.s32.totalorder %s59, %s61
      %p68 = scmp.eq.s32.totalorder %s23, 3
      %p69 = por %p67, %p68
      %p70 = scmp.ne.s32.totalorder %s61, %s62
      %p71 = scmp.eq.s32.totalorder %s23, 0
      %p72 = por %p70, %p71
      %p73 = scmp.ne.s32.totalorder %s61, %s62
      %p74 = scmp.eq.s32.totalorder %s24, 3
      %p75 = por %p73, %p74
      %p77 = scmp.ne.s32.totalorder %s62, %s76
      %p78 = scmp.eq.s32.totalorder %s24, 0
      %p79 = por %p77, %p78
      %s80 = ssub.s32 %s25, %s37
      %s81 = ssub.s32 %s26, %s33
      %s82 = sor.u32 %s80, %s81
      %p83 = scmp.eq.s32.totalorder %s82, 0
      %s85 = sadd.s32 %s84, 1
      %s86 = scalar_select %p83, %s84, %s85
      %p89 = pneg %p83
      %p90 = scmp.eq.s32.totalorder %s18, 3
      %p91 = por %p89, %p90
      %p92 = scmp.ne.s32.totalorder %s84, %s87
      %p93 = scmp.eq.s32.totalorder %s18, 0
      %p94 = por %p92, %p93
      %p95 = scmp.ne.s32.totalorder %s84, %s87
      %p96 = scmp.eq.s32.totalorder %s23, 3
      %p97 = por %p95, %p96
      %p98 = scmp.ne.s32.totalorder %s87, %s88
      %p99 = scmp.eq.s32.totalorder %s23, 0
      %p100 = por %p98, %p99
      %p101 = scmp.ne.s32.totalorder %s87, %s88
      %p102 = scmp.eq.s32.totalorder %s24, 3
      %p103 = por %p101, %p102
      %p105 = scmp.ne.s32.totalorder %s88, %s104
      %p106 = scmp.eq.s32.totalorder %s24, 0
      %p107 = por %p105, %p106
      %s108 = ssub.s32 %s25, %s37
      %s109 = ssub.s32 %s26, %s33
      %s110 = sor.u32 %s108, %s109
      %p111 = scmp.eq.s32.totalorder %s110, 0
      %s113 = sadd.s32 %s112, 1
      %s114 = scalar_select %p111, %s112, %s113
      %p117 = pneg %p111
      %p118 = scmp.eq.s32.totalorder %s18, 3
      %p119 = por %p117, %p118
      %p120 = scmp.ne.s32.totalorder %s112, %s115
      %p121 = scmp.eq.s32.totalorder %s18, 0
      %p122 = por %p120, %p121
      %p123 = scmp.ne.s32.totalorder %s112, %s115
      %p124 = scmp.eq.s32.totalorder %s23, 3
      %p125 = por %p123, %p124
      %p126 = scmp.ne.s32.totalorder %s115, %s116
      %p127 = scmp.eq.s32.totalorder %s23, 0
      %p128 = por %p126, %p127
      %p129 = scmp.ne.s32.totalorder %s115, %s116
      %p130 = scmp.eq.s32.totalorder %s24, 3
      %p131 = por %p129, %p130
      %p133 = scmp.ne.s32.totalorder %s116, %s132
      %p134 = scmp.eq.s32.totalorder %s24, 0
      %p135 = por %p133, %p134
      %s136 = ssub.s32 %s25, %s37
      %s137 = ssub.s32 %s26, %s33
      %s138 = sor.u32 %s136, %s137
      %p139 = scmp.eq.s32.totalorder %s138, 0
      %s141 = sadd.s32 %s140, 1
      %s142 = scalar_select %p139, %s140, %s141
      %p145 = pneg %p139
      %p146 = scmp.eq.s32.totalorder %s18, 3
      %p147 = por %p145, %p146
      %p148 = scmp.ne.s32.totalorder %s140, %s143
      %p149 = scmp.eq.s32.totalorder %s18, 0
      %p150 = por %p148, %p149
      %p151 = scmp.ne.s32.totalorder %s140, %s143
      %p152 = scmp.eq.s32.totalorder %s23, 3
      %p153 = por %p151, %p152
      %p154 = scmp.ne.s32.totalorder %s143, %s144
      %p155 = scmp.eq.s32.totalorder %s23, 0
      %p156 = por %p154, %p155
      %p157 = scmp.ne.s32.totalorder %s143, %s144
      %p158 = scmp.eq.s32.totalorder %s24, 3
      %p159 = por %p157, %p158
      %p161 = scmp.ne.s32.totalorder %s144, %s160
      %p162 = scmp.eq.s32.totalorder %s24, 0
      %p163 = por %p161, %p162
      %s164 = ssub.s32 %s25, %s37
      %s165 = ssub.s32 %s26, %s33
      %s166 = sor.u32 %s164, %s165
      %p167 = scmp.eq.s32.totalorder %s166, 0
      %s169 = sadd.s32 %s168, 1
      %s170 = scalar_select %p167, %s168, %s169
      %p173 = pneg %p167
      %p174 = scmp.eq.s32.totalorder %s18, 3
      %p175 = por %p173, %p174
      %p176 = scmp.ne.s32.totalorder %s168, %s171
      %p177 = scmp.eq.s32.totalorder %s18, 0
      %p178 = por %p176, %p177
      %p179 = scmp.ne.s32.totalorder %s168, %s171
      %p180 = scmp.eq.s32.totalorder %s23, 3
      %p181 = por %p179, %p180
      %p182 = scmp.ne.s32.totalorder %s171, %s172
      %p183 = scmp.eq.s32.totalorder %s23, 0
      %p184 = por %p182, %p183
      %p185 = scmp.ne.s32.totalorder %s171, %s172
      %p186 = scmp.eq.s32.totalorder %s24, 3
      %p187 = por %p185, %p186
      %p189 = scmp.ne.s32.totalorder %s172, %s188
      %p190 = scmp.eq.s32.totalorder %s24, 0
      %p191 = por %p189, %p190
      %s192 = ssub.s32 %s25, %s37
      %s193 = ssub.s32 %s26, %s33
      %s194 = sor.u32 %s192, %s193
      %p195 = scmp.eq.s32.totalorder %s194, 0
      %s197 = sadd.s32 %s196, 1
      %s198 = scalar_select %p195, %s196, %s197
      %p201 = pneg %p195
      %p202 = scmp.eq.s32.totalorder %s18, 3
      %p203 = por %p201, %p202
      %p204 = scmp.ne.s32.totalorder %s196, %s199
      %p205 = scmp.eq.s32.totalorder %s18, 0
      %p206 = por %p204, %p205
      %p207 = scmp.ne.s32.totalorder %s196, %s199
      %p208 = scmp.eq.s32.totalorder %s23, 3
      %p209 = por %p207, %p208
      %p210 = scmp.ne.s32.totalorder %s199, %s200
      %p211 = scmp.eq.s32.totalorder %s23, 0
      %p212 = por %p210, %p211
      %p213 = scmp.ne.s32.totalorder %s199, %s200
      %p214 = scmp.eq.s32.totalorder %s24, 3
      %p215 = por %p213, %p214
      %p217 = scmp.ne.s32.totalorder %s200, %s216
      %p218 = scmp.eq.s32.totalorder %s24, 0
      %p219 = por %p217, %p218
      %s220 = ssub.s32 %s25, %s37
      %s221 = ssub.s32 %s26, %s33
      %s222 = sor.u32 %s220, %s221
      %p223 = scmp.eq.s32.totalorder %s222, 0
      %s225 = sadd.s32 %s224, 1
      %s226 = scalar_select %p223, %s224, %s225
      %p229 = pneg %p223
      %p230 = scmp.eq.s32.totalorder %s18, 3
      %p231 = por %p229, %p230
      %p232 = scmp.ne.s32.totalorder %s224, %s227
      %p233 = scmp.eq.s32.totalorder %s18, 0
      %p234 = por %p232, %p233
      %p235 = scmp.ne.s32.totalorder %s224, %s227
      %p236 = scmp.eq.s32.totalorder %s23, 3
      %p237 = por %p235, %p236
      %p238 = scmp.ne.s32.totalorder %s227, %s228
      %p239 = scmp.eq.s32.totalorder %s23, 0
      %p240 = por %p238, %p239
      %p241 = scmp.ne.s32.totalorder %s227, %s228
      %p242 = scmp.eq.s32.totalorder %s24, 3
      %p243 = por %p241, %p242
      %p245 = scmp.ne.s32.totalorder %s228, %s244
      %p246 = scmp.eq.s32.totalorder %s24, 0
      %p247 = por %p245, %p246
      %s248 = ssub.s32 %s25, %s37
      %s249 = ssub.s32 %s26, %s33
      %s250 = sor.u32 %s248, %s249
      %p251 = scmp.eq.s32.totalorder %s250, 0
      %s253 = sadd.s32 %s252, 1
      %s254 = scalar_select %p251, %s252, %s253
      %p257 = pneg %p251
      %p258 = scmp.eq.s32.totalorder %s18, 3
      %p259 = por %p257, %p258
      %p260 = scmp.ne.s32.totalorder %s252, %s255
      %p261 = scmp.eq.s32.totalorder %s18, 0
      %p262 = por %p260, %p261
      %p263 = scmp.ne.s32.totalorder %s252, %s255
      %p264 = scmp.eq.s32.totalorder %s23, 3
      %p265 = por %p263, %p264
      %p266 = scmp.ne.s32.totalorder %s255, %s256
      %p267 = scmp.eq.s32.totalorder %s23, 0
      %p268 = por %p266, %p267
      %p269 = scmp.ne.s32.totalorder %s255, %s256
      %p270 = scmp.eq.s32.totalorder %s24, 3
      %p271 = por %p269, %p270
      %p273 = scmp.ne.s32.totalorder %s256, %s272
      %p274 = scmp.eq.s32.totalorder %s24, 0
      %p275 = por %p273, %p274
      %p276 = scmp.le.s32.totalorder 1, %s18
      %p277 = scmp.lt.s32.totalorder %s18, 5
      %p278 = pnand %p276, %p277
      %p279 = pneg %p278
      // Predicated region
      $region9: #{rgb_block_forward.1} parent=5 // pred_check
        _
      $region10: #{rgb_block_forward.1} parent=5 // pred_check_branch
        %281 = sbr.rel (%p278) target = $region12
      $region11: #{rgb_block_forward.1} parent=5 // pred_region
        %s282 = ssub.s32 %s18, 1
        // Predicated region
        $region13: #{rgb_block_forward.1} parent=11 // pred_check
          %p283 = pneg %p51
        $region14: #{rgb_block_forward.1} parent=11 // pred_check_branch
          %285 = sbr.rel (%p283) target = $region16
        $region15: #{rgb_block_forward.1} parent=11 // pred_region
          %s287 = ssub.s32 32, 32
          %288 = vsyncadd [#allocation4], %s287
          %s290 = sshll.u32 %s0, 4
          %s291 = int_to_ptr.vmem [resolvable:$true] %s290
          %293 = dma.vmem_to_smem %s291, 32, [#allocation2], [#allocation4]
        $region16: #{rgb_block_forward.1} parent=11 // pred_fallthru
          _
        // Predicated region
        $region17: #{rgb_block_forward.1} parent=11 // pred_check
          %p294 = pneg %p72
        $region18: #{rgb_block_forward.1} parent=11 // pred_check_branch
          %296 = sbr.rel (%p294) target = $region20
        $region19: #{rgb_block_forward.1} parent=11 // pred_region
          _
        $region20: #{rgb_block_forward.1} parent=11 // pred_fallthru
          _
      $region12: #{rgb_block_forward.1} parent=5 // pred_fallthru
        _
      %p297 = scmp.lt.s32.totalorder %s18, 4
      // Predicated region
      $region21: #{rgb_block_forward.1} parent=5 // pred_check
        %p298 = pneg %p297
      $region22: #{rgb_block_forward.1} parent=5 // pred_check_branch
        %300 = sbr.rel (%p298) target = $region24
      $region23: #{rgb_block_forward.1} parent=5 // pred_region
        // Predicated region
        $region25: #{rgb_block_forward.1} parent=23 // pred_check
          %p301 = pneg %p94
        $region26: #{rgb_block_forward.1} parent=23 // pred_check_branch
          %303 = sbr.rel (%p301) target = $region28
        $region27: #{rgb_block_forward.1} parent=23 // pred_region
          %p304 = scmp.lt.s32.totalorder %s25, 1
          %s305 = scalar_select %p304, %s25, 1
          %p306 = scmp.lt.s32.totalorder %s26, 1
          %s307 = scalar_select %p306, %s26, 1
          %s308 = smul.addr %s305, 2
          %s309 = sadd.s32 %s307, %s308
          %s310 = smul.addr %s309, 8
          %s311 = scalar_lea.vmem %s2, %s310
        $region28: #{rgb_block_forward.1} parent=23 // pred_fallthru
          _
        // Predicated region
        $region29: #{rgb_block_forward.1} parent=23 // pred_check
          %p312 = pneg %p122
        $region30: #{rgb_block_forward.1} parent=23 // pred_check_branch
          %314 = sbr.rel (%p312) target = $region32
        $region31: #{rgb_block_forward.1} parent=23 // pred_region
          %p315 = scmp.lt.s32.totalorder %s25, 1
          %s316 = scalar_select %p315, %s25, 1
          %p317 = scmp.lt.s32.totalorder %s26, 1
          %s318 = scalar_select %p317, %s26, 1
          %s319 = smul.addr %s316, 2
          %s320 = sadd.s32 %s318, %s319
          %s321 = smul.addr %s320, 8
          %s322 = scalar_lea.vmem %s3, %s321
        $region32: #{rgb_block_forward.1} parent=23 // pred_fallthru
          _
        // Predicated region
        $region33: #{rgb_block_forward.1} parent=23 // pred_check
          %p323 = pneg %p150
        $region34: #{rgb_block_forward.1} parent=23 // pred_check_branch
          %325 = sbr.rel (%p323) target = $region36
        $region35: #{rgb_block_forward.1} parent=23 // pred_region
          %p326 = scmp.lt.s32.totalorder %s25, 1
          %s327 = scalar_select %p326, %s25, 1
          %p328 = scmp.lt.s32.totalorder %s26, 1
          %s329 = scalar_select %p328, %s26, 1
          %s330 = smul.addr %s327, 2
          %s331 = sadd.s32 %s329, %s330
          %s332 = smul.addr %s331, 8
          %s333 = scalar_lea.vmem %s4, %s332
        $region36: #{rgb_block_forward.1} parent=23 // pred_fallthru
          _
        // Predicated region
        $region37: #{rgb_block_forward.1} parent=23 // pred_check
          %p334 = pneg %p178
        $region38: #{rgb_block_forward.1} parent=23 // pred_check_branch
          %336 = sbr.rel (%p334) target = $region40
        $region39: #{rgb_block_forward.1} parent=23 // pred_region
          %p337 = scmp.lt.s32.totalorder %s25, 1
          %s338 = scalar_select %p337, %s25, 1
          %p339 = scmp.lt.s32.totalorder %s26, 1
          %s340 = scalar_select %p339, %s26, 1
          %s341 = smul.addr %s338, 2
          %s342 = sadd.s32 %s340, %s341
          %s343 = smul.addr %s342, 4
          %s344 = scalar_lea.vmem %s5, %s343
        $region40: #{rgb_block_forward.1} parent=23 // pred_fallthru
          _
        // Predicated region
        $region41: #{rgb_block_forward.1} parent=23 // pred_check
          %p345 = pneg %p206
        $region42: #{rgb_block_forward.1} parent=23 // pred_check_branch
          %347 = sbr.rel (%p345) target = $region44
        $region43: #{rgb_block_forward.1} parent=23 // pred_region
          %p348 = scmp.lt.s32.totalorder %s25, 1
          %s349 = scalar_select %p348, %s25, 1
          %p350 = scmp.lt.s32.totalorder %s26, 1
          %s351 = scalar_select %p350, %s26, 1
          %s352 = smul.addr %s349, 2
          %s353 = sadd.s32 %s351, %s352
          %s354 = smul.addr %s353, 4
          %s355 = scalar_lea.vmem %s6, %s354
        $region44: #{rgb_block_forward.1} parent=23 // pred_fallthru
          _
        // Predicated region
        $region45: #{rgb_block_forward.1} parent=23 // pred_check
          %p356 = pneg %p234
        $region46: #{rgb_block_forward.1} parent=23 // pred_check_branch
          %358 = sbr.rel (%p356) target = $region48
        $region47: #{rgb_block_forward.1} parent=23 // pred_region
          %p359 = scmp.lt.s32.totalorder %s25, 1
          %s360 = scalar_select %p359, %s25, 1
          %p361 = scmp.lt.s32.totalorder %s26, 1
          %s362 = scalar_select %p361, %s26, 1
          %s363 = smul.addr %s360, 2
          %s364 = sadd.s32 %s362, %s363
          %s365 = smul.addr %s364, 4
          %s366 = scalar_lea.vmem %s7, %s365
        $region48: #{rgb_block_forward.1} parent=23 // pred_fallthru
          _
      $region24: #{rgb_block_forward.1} parent=5 // pred_fallthru
        _
      %p367 = scmp.le.s32.totalorder 1, %s18
      %p368 = scmp.lt.s32.totalorder %s18, 5
      %p369 = pnand %p367, %p368
      %p370 = pneg %p369
      // Predicated region
      $region49: #{rgb_block_forward.1} parent=5 // pred_check
        _
      $region50: #{rgb_block_forward.1} parent=5 // pred_check_branch
        %372 = sbr.rel (%p369) target = $region52
      $region51: #{rgb_block_forward.1} parent=5 // pred_region
        %s373 = ssub.s32 %s18, 1
        // Predicated region
        $region53: #{rgb_block_forward.1} parent=51 // pred_check
          %p374 = pneg %p51
        $region54: #{rgb_block_forward.1} parent=51 // pred_check_branch
          %376 = sbr.rel (%p374) target = $region56
        $region55: #{rgb_block_forward.1} parent=51 // pred_region
          %377 = dma.done [#allocation4], 32
        $region56: #{rgb_block_forward.1} parent=51 // pred_fallthru
          _
        %378 = sfence
        %p379 = pneg %p51
        %p380 = pneg %p48
        %p381 = pneg %p72
        %p382 = pneg %p69
        %p383 = scmp.lt.s32.totalorder %s27, 1
        %s384 = scalar_select %p383, %s27, 1
        %p385 = scmp.lt.s32.totalorder %s28, 1
        %s386 = scalar_select %p385, %s28, 1
        %s387 = smul.addr %s384, 2
        %s388 = sadd.s32 %s386, %s387
        %s389 = smul.addr %s388, 8
        %s390 = scalar_lea.vmem %s2, %s389
        %p391 = pneg %p100
        %p392 = pneg %p97
        %p393 = scmp.lt.s32.totalorder %s27, 1
        %s394 = scalar_select %p393, %s27, 1
        %p395 = scmp.lt.s32.totalorder %s28, 1
        %s396 = scalar_select %p395, %s28, 1
        %s397 = smul.addr %s394, 2
        %s398 = sadd.s32 %s396, %s397
        %s399 = smul.addr %s398, 8
        %s400 = scalar_lea.vmem %s3, %s399
        %p401 = pneg %p128
        %p402 = pneg %p125
        %p403 = scmp.lt.s32.totalorder %s27, 1
        %s404 = scalar_select %p403, %s27, 1
        %p405 = scmp.lt.s32.totalorder %s28, 1
        %s406 = scalar_select %p405, %s28, 1
        %s407 = smul.addr %s404, 2
        %s408 = sadd.s32 %s406, %s407
        %s409 = smul.addr %s408, 8
        %s410 = scalar_lea.vmem %s4, %s409
        %p411 = pneg %p156
        %p412 = pneg %p153
        %p413 = scmp.lt.s32.totalorder %s27, 1
        %s414 = scalar_select %p413, %s27, 1
        %p415 = scmp.lt.s32.totalorder %s28, 1
        %s416 = scalar_select %p415, %s28, 1
        %s417 = smul.addr %s414, 2
        %s418 = sadd.s32 %s416, %s417
        %s419 = smul.addr %s418, 4
        %s420 = scalar_lea.vmem %s5, %s419
        %p421 = pneg %p184
        %p422 = pneg %p181
        %p423 = scmp.lt.s32.totalorder %s27, 1
        %s424 = scalar_select %p423, %s27, 1
        %p425 = scmp.lt.s32.totalorder %s28, 1
        %s426 = scalar_select %p425, %s28, 1
        %s427 = smul.addr %s424, 2
        %s428 = sadd.s32 %s426, %s427
        %s429 = smul.addr %s428, 4
        %s430 = scalar_lea.vmem %s6, %s429
        %p431 = pneg %p212
        %p432 = pneg %p209
        %p433 = scmp.lt.s32.totalorder %s27, 1
        %s434 = scalar_select %p433, %s27, 1
        %p435 = scmp.lt.s32.totalorder %s28, 1
        %s436 = scalar_select %p435, %s28, 1
        %s437 = smul.addr %s434, 2
        %s438 = sadd.s32 %s436, %s437
        %s439 = smul.addr %s438, 4
        %s440 = scalar_lea.vmem %s7, %s439
        %p441 = pneg %p240
        %p442 = pneg %p237
        %p443 = pneg %p268
        %p444 = pneg %p265
        %s445 = sand.u32 %s255, 1
        %s446 = scalar_lea.sflag [#allocation3], %s445
        %s447 = sand.u32 %s255, 1
        %s448 = smul.addr %s447, 48
        %s449 = scalar_lea.vmem [#allocation5], %s448
        %p450 = scmp.lt.s32.totalorder %s27, 1
        %s451 = scalar_select %p450, %s27, 1
        %p452 = scmp.lt.s32.totalorder %s28, 1
        %s453 = scalar_select %p452, %s28, 1
        %s454 = smul.addr %s451, 2
        %s455 = sadd.s32 %s453, %s454
        %s456 = smul.addr %s455, 8
        %s457 = scalar_lea.vmem %s2, %s456
        %p458 = scmp.lt.s32.totalorder %s27, 1
        %s459 = scalar_select %p458, %s27, 1
        %p460 = scmp.lt.s32.totalorder %s28, 1
        %s461 = scalar_select %p460, %s28, 1
        %s462 = smul.addr %s459, 2
        %s463 = sadd.s32 %s461, %s462
        %s464 = smul.addr %s463, 8
        %s465 = scalar_lea.vmem %s3, %s464
        %p466 = scmp.lt.s32.totalorder %s27, 1
        %s467 = scalar_select %p466, %s27, 1
        %p468 = scmp.lt.s32.totalorder %s28, 1
        %s469 = scalar_select %p468, %s28, 1
        %s470 = smul.addr %s467, 2
        %s471 = sadd.s32 %s469, %s470
        %s472 = smul.addr %s471, 8
        %s473 = scalar_lea.vmem %s4, %s472
        %p474 = scmp.lt.s32.totalorder %s27, 1
        %s475 = scalar_select %p474, %s27, 1
        %p476 = scmp.lt.s32.totalorder %s28, 1
        %s477 = scalar_select %p476, %s28, 1
        %s478 = smul.addr %s475, 2
        %s479 = sadd.s32 %s477, %s478
        %s480 = smul.addr %s479, 4
        %s481 = scalar_lea.vmem %s5, %s480
        %p482 = scmp.lt.s32.totalorder %s27, 1
        %s483 = scalar_select %p482, %s27, 1
        %p484 = scmp.lt.s32.totalorder %s28, 1
        %s485 = scalar_select %p484, %s28, 1
        %s486 = smul.addr %s483, 2
        %s487 = sadd.s32 %s485, %s486
        %s488 = smul.addr %s487, 4
        %s489 = scalar_lea.vmem %s6, %s488
        %p490 = scmp.lt.s32.totalorder %s27, 1
        %s491 = scalar_select %p490, %s27, 1
        %p492 = scmp.lt.s32.totalorder %s28, 1
        %s493 = scalar_select %p492, %s28, 1
        %s494 = smul.addr %s491, 2
        %s495 = sadd.s32 %s493, %s494
        %s496 = smul.addr %s495, 4
        %s497 = scalar_lea.vmem %s7, %s496
        %s498 = smul.u32 2, %s28
        %v499 = vld [vmem:[%s457] sm:$0xff]
        %s500 = smul.u32 %s27, 128
        %s501 = sld [smem:[#allocation2 + %s500]]
        %v502 = vstv %s501
        %v503 = vmul.f32 %v502, %v499
        %s504 = sadd.s32 %s500, 8
        %s505 = sld [smem:[#allocation2 + %s504]]
        %v506 = vstv %s505
        %v507 = vmul.f32 %v506, %v499
        %s508 = sadd.s32 %s500, 16
        %s509 = sld [smem:[#allocation2 + %s508]]
        %v510 = vstv %s509
        %v511 = vmul.f32 %v510, %v499
        %s512 = sadd.s32 %s500, 1
        %s513 = sld [smem:[#allocation2 + %s512]]
        %v514 = vstv %s513
        %v515 = vmul.f32 %v514, %v499
        %v517 = vrot.slane %v515, 1
        %v519 = vadd.f32 %v503, %v517
        %s520 = sadd.s32 %s500, 9
        %s521 = sld [smem:[#allocation2 + %s520]]
        %v522 = vstv %s521
        %v523 = vmul.f32 %v522, %v499
        %v525 = vrot.slane %v523, 1
        %v527 = vadd.f32 %v507, %v525
        %s528 = sadd.s32 %s500, 17
        %s529 = sld [smem:[#allocation2 + %s528]]
        %v530 = vstv %s529
        %v531 = vmul.f32 %v530, %v499
        %v533 = vrot.slane %v531, 1
        %v535 = vadd.f32 %v511, %v533
        %s536 = sadd.s32 %s500, 2
        %s537 = sld [smem:[#allocation2 + %s536]]
        %v538 = vstv %s537
        %v539 = vmul.f32 %v538, %v499
        %v541 = vrot.slane %v539, 2
        %v543 = vadd.f32 %v519, %v541
        %s544 = sadd.s32 %s500, 10
        %s545 = sld [smem:[#allocation2 + %s544]]
        %v546 = vstv %s545
        %v547 = vmul.f32 %v546, %v499
        %v549 = vrot.slane %v547, 2
        %v551 = vadd.f32 %v527, %v549
        %s552 = sadd.s32 %s500, 18
        %s553 = sld [smem:[#allocation2 + %s552]]
        %v554 = vstv %s553
        %v555 = vmul.f32 %v554, %v499
        %v557 = vrot.slane %v555, 2
        %v559 = vadd.f32 %v535, %v557
        %s560 = sadd.s32 %s500, 3
        %s561 = sld [smem:[#allocation2 + %s560]]
        %v562 = vstv %s561
        %v563 = vmul.f32 %v562, %v499
        %v565 = vrot.slane %v563, 3
        %v567 = vadd.f32 %v543, %v565
        %s568 = sadd.s32 %s500, 11
        %s569 = sld [smem:[#allocation2 + %s568]]
        %v570 = vstv %s569
        %v571 = vmul.f32 %v570, %v499
        %v573 = vrot.slane %v571, 3
        %v575 = vadd.f32 %v551, %v573
        %s576 = sadd.s32 %s500, 19
        %s577 = sld [smem:[#allocation2 + %s576]]
        %v578 = vstv %s577
        %v579 = vmul.f32 %v578, %v499
        %v581 = vrot.slane %v579, 3
        %v583 = vadd.f32 %v559, %v581
        %s584 = sadd.s32 %s500, 4
        %s585 = sld [smem:[#allocation2 + %s584]]
        %v586 = vstv %s585
        %v587 = vmul.f32 %v586, %v499
        %v589 = vrot.slane %v587, 4
        %v591 = vadd.f32 %v567, %v589
        %s592 = sadd.s32 %s500, 12
        %s593 = sld [smem:[#allocation2 + %s592]]
        %v594 = vstv %s593
        %v595 = vmul.f32 %v594, %v499
        %v597 = vrot.slane %v595, 4
        %v599 = vadd.f32 %v575, %v597
        %s600 = sadd.s32 %s500, 20
        %s601 = sld [smem:[#allocation2 + %s600]]
        %v602 = vstv %s601
        %v603 = vmul.f32 %v602, %v499
        %v605 = vrot.slane %v603, 4
        %v607 = vadd.f32 %v583, %v605
        %s608 = sadd.s32 %s500, 5
        %s609 = sld [smem:[#allocation2 + %s608]]
        %v610 = vstv %s609
        %v611 = vmul.f32 %v610, %v499
        %v613 = vrot.slane %v611, 5
        %v615 = vadd.f32 %v591, %v613
        %s616 = sadd.s32 %s500, 13
        %s617 = sld [smem:[#allocation2 + %s616]]
        %v618 = vstv %s617
        %v619 = vmul.f32 %v618, %v499
        %v621 = vrot.slane %v619, 5
        %v623 = vadd.f32 %v599, %v621
        %s624 = sadd.s32 %s500, 21
        %s625 = sld [smem:[#allocation2 + %s624]]
        %v626 = vstv %s625
        %v627 = vmul.f32 %v626, %v499
        %v629 = vrot.slane %v627, 5
        %v631 = vadd.f32 %v607, %v629
        %s632 = sadd.s32 %s500, 6
        %s633 = sld [smem:[#allocation2 + %s632]]
        %v634 = vstv %s633
        %v635 = vmul.f32 %v634, %v499
        %v637 = vrot.slane %v635, 6
        %v639 = vadd.f32 %v615, %v637
        %s640 = sadd.s32 %s500, 14
        %s641 = sld [smem:[#allocation2 + %s640]]
        %v642 = vstv %s641
        %v643 = vmul.f32 %v642, %v499
        %v645 = vrot.slane %v643, 6
        %v647 = vadd.f32 %v623, %v645
        %s648 = sadd.s32 %s500, 22
        %s649 = sld [smem:[#allocation2 + %s648]]
        %v650 = vstv %s649
        %v651 = vmul.f32 %v650, %v499
        %v653 = vrot.slane %v651, 6
        %v655 = vadd.f32 %v631, %v653
        %s656 = sadd.s32 %s500, 7
        %s657 = sld [smem:[#allocation2 + %s656]]
        %v658 = vstv %s657
        %v659 = vmul.f32 %v658, %v499
        %v661 = vrot.slane %v659, 7
        %v663 = vadd.f32 %v639, %v661
        %s664 = sadd.s32 %s500, 15
        %s665 = sld [smem:[#allocation2 + %s664]]
        %v666 = vstv %s665
        %v667 = vmul.f32 %v666, %v499
        %v669 = vrot.slane %v667, 7
        %v671 = vadd.f32 %v647, %v669
        %s672 = sadd.s32 %s500, 23
        %s673 = sld [smem:[#allocation2 + %s672]]
        %v674 = vstv %s673
        %v675 = vmul.f32 %v674, %v499
        %v677 = vrot.slane %v675, 7
        %v679 = vadd.f32 %v655, %v677
        %v681 = vrot.slane %v671, 7
        %v684 = vrot.slane %v679, 6
        %vm686 = vcmask 1040384
        %v687 = vsel %vm686, %v663, %v681
        %vm688 = vcmask 1041408
        %v689 = vsel %vm688, %v687, %v684
        %v690 = vld [vmem:[%s481] sm:$0x7]
        %v691 = vadd.f32 %v689, %v690
        %v692 = vld [vmem:[%s465] sm:$0xff]
        %v693 = vmul.f32 %v502, %v692
        %v694 = vmul.f32 %v506, %v692
        %v695 = vmul.f32 %v510, %v692
        %v696 = vmul.f32 %v514, %v692
        %v698 = vrot.slane %v696, 1
        %v700 = vadd.f32 %v693, %v698
        %v701 = vmul.f32 %v522, %v692
        %v703 = vrot.slane %v701, 1
        %v705 = vadd.f32 %v694, %v703
        %v706 = vmul.f32 %v530, %v692
        %v708 = vrot.slane %v706, 1
        %v710 = vadd.f32 %v695, %v708
        %v711 = vmul.f32 %v538, %v692
        %v713 = vrot.slane %v711, 2
        %v715 = vadd.f32 %v700, %v713
        %v716 = vmul.f32 %v546, %v692
        %v718 = vrot.slane %v716, 2
        %v720 = vadd.f32 %v705, %v718
        %v721 = vmul.f32 %v554, %v692
        %v723 = vrot.slane %v721, 2
        %v725 = vadd.f32 %v710, %v723
        %v726 = vmul.f32 %v562, %v692
        %v728 = vrot.slane %v726, 3
        %v730 = vadd.f32 %v715, %v728
        %v731 = vmul.f32 %v570, %v692
        %v733 = vrot.slane %v731, 3
        %v735 = vadd.f32 %v720, %v733
        %v736 = vmul.f32 %v578, %v692
        %v738 = vrot.slane %v736, 3
        %v740 = vadd.f32 %v725, %v738
        %v741 = vmul.f32 %v586, %v692
        %v743 = vrot.slane %v741, 4
        %v745 = vadd.f32 %v730, %v743
        %v746 = vmul.f32 %v594, %v692
        %v748 = vrot.slane %v746, 4
        %v750 = vadd.f32 %v735, %v748
        %v751 = vmul.f32 %v602, %v692
        %v753 = vrot.slane %v751, 4
        %v755 = vadd.f32 %v740, %v753
        %v756 = vmul.f32 %v610, %v692
        %v758 = vrot.slane %v756, 5
        %v760 = vadd.f32 %v745, %v758
        %v761 = vmul.f32 %v618, %v692
        %v763 = vrot.slane %v761, 5
        %v765 = vadd.f32 %v750, %v763
        %v766 = vmul.f32 %v626, %v692
        %v768 = vrot.slane %v766, 5
        %v770 = vadd.f32 %v755, %v768
        %v771 = vmul.f32 %v634, %v692
        %v773 = vrot.slane %v771, 6
        %v775 = vadd.f32 %v760, %v773
        %v776 = vmul.f32 %v642, %v692
        %v778 = vrot.slane %v776, 6
        %v780 = vadd.f32 %v765, %v778
        %v781 = vmul.f32 %v650, %v692
        %v783 = vrot.slane %v781, 6
        %v785 = vadd.f32 %v770, %v783
        %v786 = vmul.f32 %v658, %v692
        %v788 = vrot.slane %v786, 7
        %v790 = vadd.f32 %v775, %v788
        %v791 = vmul.f32 %v666, %v692
        %v793 = vrot.slane %v791, 7
        %v795 = vadd.f32 %v780, %v793
        %v796 = vmul.f32 %v674, %v692
        %v798 = vrot.slane %v796, 7
        %v800 = vadd.f32 %v785, %v798
        %v802 = vrot.slane %v795, 7
        %v805 = vrot.slane %v800, 6
        %v807 = vsel %vm686, %v790, %v802
        %v808 = vsel %vm688, %v807, %v805
        %v809 = vld [vmem:[%s473] sm:$0xff]
        %v810 = vmul.f32 %v502, %v809
        %v811 = vmul.f32 %v506, %v809
        %v812 = vmul.f32 %v510, %v809
        %v813 = vmul.f32 %v514, %v809
        %v815 = vrot.slane %v813, 1
        %v817 = vadd.f32 %v810, %v815
        %v818 = vmul.f32 %v522, %v809
        %v820 = vrot.slane %v818, 1
        %v822 = vadd.f32 %v811, %v820
        %v823 = vmul.f32 %v530, %v809
        %v825 = vrot.slane %v823, 1
        %v827 = vadd.f32 %v812, %v825
        %v828 = vmul.f32 %v538, %v809
        %v830 = vrot.slane %v828, 2
        %v832 = vadd.f32 %v817, %v830
        %v833 = vmul.f32 %v546, %v809
        %v835 = vrot.slane %v833, 2
        %v837 = vadd.f32 %v822, %v835
        %v838 = vmul.f32 %v554, %v809
        %v840 = vrot.slane %v838, 2
        %v842 = vadd.f32 %v827, %v840
        %v843 = vmul.f32 %v562, %v809
        %v845 = vrot.slane %v843, 3
        %v847 = vadd.f32 %v832, %v845
        %v848 = vmul.f32 %v570, %v809
        %v850 = vrot.slane %v848, 3
        %v852 = vadd.f32 %v837, %v850
        %v853 = vmul.f32 %v578, %v809
        %v855 = vrot.slane %v853, 3
        %v857 = vadd.f32 %v842, %v855
        %v858 = vmul.f32 %v586, %v809
        %v860 = vrot.slane %v858, 4
        %v862 = vadd.f32 %v847, %v860
        %v863 = vmul.f32 %v594, %v809
        %v865 = vrot.slane %v863, 4
        %v867 = vadd.f32 %v852, %v865
        %v868 = vmul.f32 %v602, %v809
        %v870 = vrot.slane %v868, 4
        %v872 = vadd.f32 %v857, %v870
        %v873 = vmul.f32 %v610, %v809
        %v875 = vrot.slane %v873, 5
        %v877 = vadd.f32 %v862, %v875
        %v878 = vmul.f32 %v618, %v809
        %v880 = vrot.slane %v878, 5
        %v882 = vadd.f32 %v867, %v880
        %v883 = vmul.f32 %v626, %v809
        %v885 = vrot.slane %v883, 5
        %v887 = vadd.f32 %v872, %v885
        %v888 = vmul.f32 %v634, %v809
        %v890 = vrot.slane %v888, 6
        %v892 = vadd.f32 %v877, %v890
        %v893 = vmul.f32 %v642, %v809
        %v895 = vrot.slane %v893, 6
        %v897 = vadd.f32 %v882, %v895
        %v898 = vmul.f32 %v650, %v809
        %v900 = vrot.slane %v898, 6
        %v902 = vadd.f32 %v887, %v900
        %v903 = vmul.f32 %v658, %v809
        %v905 = vrot.slane %v903, 7
        %v907 = vadd.f32 %v892, %v905
        %v908 = vmul.f32 %v666, %v809
        %v910 = vrot.slane %v908, 7
        %v912 = vadd.f32 %v897, %v910
        %v913 = vmul.f32 %v674, %v809
        %v915 = vrot.slane %v913, 7
        %v917 = vadd.f32 %v902, %v915
        %v919 = vrot.slane %v912, 7
        %v922 = vrot.slane %v917, 6
        %v924 = vsel %vm686, %v907, %v919
        %v925 = vsel %vm688, %v924, %v922
        %v926 = vld [vmem:[%s489] sm:$0x7]
        %v927 = vadd.f32 %v808, %v926
        %v928 = vld [vmem:[%s497] sm:$0x7]
        %v929 = vadd.f32 %v925, %v928
        %v932 = vunpack.c.l.s4 1966171168
        %v933 = vunpack.c.0.s8 %v932
        %v934 = vlaneseq
        %v935 = vshrl.u32 %v934, 7
        %v936 = vsub.s32 %v933, %v935
        %v937 = vrot.slane %v691, %v936
        %v938 = vcombine.high %v937, %v937
        %v940 = vunpack.c.l.s4 1966171168
        %v941 = vunpack.c.0.s8 %v940
        %v942 = vlaneseq
        %v943 = vshrl.u32 %v942, 7
        %v944 = vsub.s32 %v941, %v943
        %v945 = vrot.slane %v937, %v944
        %v947 = vunpack.c.l.s4 1966171168
        %v948 = vunpack.c.0.s8 %v947
        %v949 = vlaneseq
        %v950 = vshrl.u32 %v949, 7
        %v951 = vsub.s32 %v948, %v950
        %v952 = vrot.slane %v938, %v951
        %v953 = vcombine.high %v945, %v945
        %v957 = vlaneseq
        %v958 = vshrl.u32 %v957, 7
        %v959 = vsub.s32 0, %v958
        %v960 = vrot.slane %v945, %v959
        %v961 = vlaneseq
        %v962 = vshrl.u32 %v961, 7
        %v963 = vsub.s32 0, %v962
        %v964 = vrot.slane %v952, %v963
        %v965 = vlaneseq
        %v966 = vshrl.u32 %v965, 7
        %v967 = vsub.s32 0, %v966
        %v968 = vrot.slane %v953, %v967
        %969 = vrot.lane.b32.xlu0 %v960, 112
        %v970 = vpop.permute.xlu0 %969
        %971 = vrot.lane.b32.xlu0 %v964, 112
        %v972 = vpop.permute.xlu0 %971
        %973 = vrot.lane.b32.xlu0 %v968, 112
        %v974 = vpop.permute.xlu0 %973
        %978 = vrot.lane.b32.xlu0 %v960, 96
        %v979 = vpop.permute.xlu0 %978
        %980 = vrot.lane.b32.xlu0 %v964, 96
        %v981 = vpop.permute.xlu0 %980
        %982 = vrot.lane.b32.xlu0 %v968, 96
        %v983 = vpop.permute.xlu0 %982
        %987 = vrot.lane.b32.xlu0 %v960, 80
        %v988 = vpop.permute.xlu0 %987
        %989 = vrot.lane.b32.xlu0 %v964, 80
        %v990 = vpop.permute.xlu0 %989
        %991 = vrot.lane.b32.xlu0 %v968, 80
        %v992 = vpop.permute.xlu0 %991
        %996 = vrot.lane.b32.xlu0 %v960, 64
        %v997 = vpop.permute.xlu0 %996
        %998 = vrot.lane.b32.xlu0 %v964, 64
        %v999 = vpop.permute.xlu0 %998
        %1000 = vrot.lane.b32.xlu0 %v968, 64
        %v1001 = vpop.permute.xlu0 %1000
        %1005 = vrot.lane.b32.xlu0 %v960, 48
        %v1006 = vpop.permute.xlu0 %1005
        %1007 = vrot.lane.b32.xlu0 %v964, 48
        %v1008 = vpop.permute.xlu0 %1007
        %1009 = vrot.lane.b32.xlu0 %v968, 48
        %v1010 = vpop.permute.xlu0 %1009
        %1014 = vrot.lane.b32.xlu0 %v960, 32
        %v1015 = vpop.permute.xlu0 %1014
        %1016 = vrot.lane.b32.xlu0 %v964, 32
        %v1017 = vpop.permute.xlu0 %1016
        %1018 = vrot.lane.b32.xlu0 %v968, 32
        %v1019 = vpop.permute.xlu0 %1018
        %1023 = vrot.lane.b32.xlu0 %v960, 16
        %v1024 = vpop.permute.xlu0 %1023
        %1025 = vrot.lane.b32.xlu0 %v964, 16
        %v1026 = vpop.permute.xlu0 %1025
        %1027 = vrot.lane.b32.xlu0 %v968, 16
        %v1028 = vpop.permute.xlu0 %1027
        %v1032 = vsel %vm686, %v945, %v970
        %v1033 = vsel %vm686, %v952, %v972
        %v1034 = vsel %vm686, %v953, %v974
        %v1035 = vsel %vm688, %v1032, %v979
        %v1036 = vsel %vm688, %v1033, %v981
        %v1037 = vsel %vm688, %v1034, %v983
        %vm1038 = vcmask 1042432
        %v1039 = vsel %vm1038, %v1035, %v988
        %v1040 = vsel %vm1038, %v1036, %v990
        %v1041 = vsel %vm1038, %v1037, %v992
        %vm1042 = vcmask 1043456
        %v1043 = vsel %vm1042, %v1039, %v997
        %v1044 = vsel %vm1042, %v1040, %v999
        %v1045 = vsel %vm1042, %v1041, %v1001
        %vm1046 = vcmask 1044480
        %v1047 = vsel %vm1046, %v1043, %v1006
        %v1048 = vsel %vm1046, %v1044, %v1008
        %v1049 = vsel %vm1046, %v1045, %v1010
        %vm1050 = vcmask 1045504
        %v1051 = vsel %vm1050, %v1047, %v1015
        %v1052 = vsel %vm1050, %v1048, %v1017
        %v1053 = vsel %vm1050, %v1049, %v1019
        %vm1054 = vcmask 1046528
        %v1055 = vsel %vm1054, %v1051, %v1024
        %v1056 = vsel %vm1054, %v1052, %v1026
        %v1057 = vsel %vm1054, %v1053, %v1028
        %v1060 = vunpack.c.l.s4 1966171168
        %v1061 = vunpack.c.0.s8 %v1060
        %v1062 = vlaneseq
        %v1063 = vshrl.u32 %v1062, 7
        %v1064 = vsub.s32 %v1061, %v1063
        %v1065 = vrot.slane %v927, %v1064
        %v1066 = vcombine.high %v1065, %v1065
        %v1068 = vunpack.c.l.s4 1966171168
        %v1069 = vunpack.c.0.s8 %v1068
        %v1070 = vlaneseq
        %v1071 = vshrl.u32 %v1070, 7
        %v1072 = vsub.s32 %v1069, %v1071
        %v1073 = vrot.slane %v1065, %v1072
        %v1075 = vunpack.c.l.s4 1966171168
        %v1076 = vunpack.c.0.s8 %v1075
        %v1077 = vlaneseq
        %v1078 = vshrl.u32 %v1077, 7
        %v1079 = vsub.s32 %v1076, %v1078
        %v1080 = vrot.slane %v1066, %v1079
        %v1081 = vcombine.high %v1073, %v1073
        %v1088 = vrot.slane %v1055, 7
        %v1089 = vrot.slane %v1056, 7
        %v1090 = vrot.slane %v1057, 7
        %v1094 = vsel %vm686, %v1073, %v1088
        %v1095 = vsel %vm686, %v1080, %v1089
        %v1096 = vsel %vm686, %v1081, %v1090
        %v1099 = vunpack.c.l.s4 1966171168
        %v1100 = vunpack.c.0.s8 %v1099
        %v1101 = vlaneseq
        %v1102 = vshrl.u32 %v1101, 7
        %v1103 = vsub.s32 %v1100, %v1102
        %v1104 = vrot.slane %v929, %v1103
        %v1105 = vcombine.high %v1104, %v1104
        %v1107 = vunpack.c.l.s4 1966171168
        %v1108 = vunpack.c.0.s8 %v1107
        %v1109 = vlaneseq
        %v1110 = vshrl.u32 %v1109, 7
        %v1111 = vsub.s32 %v1108, %v1110
        %v1112 = vrot.slane %v1104, %v1111
        %v1114 = vunpack.c.l.s4 1966171168
        %v1115 = vunpack.c.0.s8 %v1114
        %v1116 = vlaneseq
        %v1117 = vshrl.u32 %v1116, 7
        %v1118 = vsub.s32 %v1115, %v1117
        %v1119 = vrot.slane %v1105, %v1118
        %v1120 = vcombine.high %v1112, %v1112
        %v1121 = vrot.slane %v1055, 1
        %v1122 = vrot.slane %v1056, 1
        %v1123 = vrot.slane %v1057, 1
        %v1127 = vlaneseq
        %v1128 = vshrl.u32 %v1127, 7
        %v1129 = vsub.s32 0, %v1128
        %v1130 = vrot.slane %v1112, %v1129
        %v1131 = vlaneseq
        %v1132 = vshrl.u32 %v1131, 7
        %v1133 = vsub.s32 0, %v1132
        %v1134 = vrot.slane %v1119, %v1133
        %v1135 = vlaneseq
        %v1136 = vshrl.u32 %v1135, 7
        %v1137 = vsub.s32 0, %v1136
        %v1138 = vrot.slane %v1120, %v1137
        %v1142 = vsel %vm1054, %v1121, %v1130
        %v1143 = vsel %vm1054, %v1122, %v1134
        %v1144 = vsel %vm1054, %v1123, %v1138
        %v1145 = vmul.f32 %v1094, 0.25
        %v1146 = vmul.f32 %v1095, 0.25
        %v1147 = vmul.f32 %v1096, 0.25
        %v1148 = vmul.f32 %v1055, 0.75
        %v1149 = vmul.f32 %v1056, 0.75
        %v1150 = vmul.f32 %v1057, 0.75
        %v1151 = vadd.f32 %v1145, %v1148
        %v1152 = vadd.f32 %v1146, %v1149
        %v1153 = vadd.f32 %v1147, %v1150
        %v1154 = vmul.f32 %v1142, 0.25
        %v1155 = vmul.f32 %v1143, 0.25
        %v1156 = vmul.f32 %v1144, 0.25
        %v1157 = vadd.f32 %v1148, %v1154
        %v1158 = vadd.f32 %v1149, %v1155
        %v1159 = vadd.f32 %v1150, %v1156
        %v1163 = vrot.slane %v1157, 7
        %v1164 = vrot.slane %v1158, 7
        %v1165 = vrot.slane %v1159, 7
        %v1172 = vrot.slane %v1151, 7
        %v1173 = vrot.slane %v1152, 7
        %v1174 = vrot.slane %v1153, 7
        %v1178 = vrot.slane %v1157, 6
        %v1179 = vrot.slane %v1158, 6
        %v1180 = vrot.slane %v1159, 6
        %v1184 = vrot.slane %v1151, 6
        %v1185 = vrot.slane %v1152, 6
        %v1186 = vrot.slane %v1153, 6
        %v1190 = vrot.slane %v1157, 5
        %v1191 = vrot.slane %v1158, 5
        %v1192 = vrot.slane %v1159, 5
        %v1196 = vrot.slane %v1151, 5
        %v1197 = vrot.slane %v1152, 5
        %v1198 = vrot.slane %v1153, 5
        %v1202 = vrot.slane %v1157, 4
        %v1203 = vrot.slane %v1158, 4
        %v1204 = vrot.slane %v1159, 4
        %v1208 = vrot.slane %v1151, 4
        %v1209 = vrot.slane %v1152, 4
        %v1210 = vrot.slane %v1153, 4
        %v1214 = vrot.slane %v1157, 3
        %v1215 = vrot.slane %v1158, 3
        %v1216 = vrot.slane %v1159, 3
        %v1220 = vrot.slane %v1151, 3
        %v1221 = vrot.slane %v1152, 3
        %v1222 = vrot.slane %v1153, 3
        %v1226 = vrot.slane %v1157, 2
        %v1227 = vrot.slane %v1158, 2
        %v1228 = vrot.slane %v1159, 2
        %v1232 = vrot.slane %v1151, 2
        %v1233 = vrot.slane %v1152, 2
        %v1234 = vrot.slane %v1153, 2
        %v1238 = vrot.slane %v1157, 1
        %v1239 = vrot.slane %v1158, 1
        %v1240 = vrot.slane %v1159, 1
        %v1244 = vrot.slane %v1151, 1
        %v1245 = vrot.slane %v1152, 1
        %v1246 = vrot.slane %v1153, 1
        %v1250 = vsel %vm686, %v1151, %v1163
        %v1251 = vsel %vm686, %v1152, %v1164
        %v1252 = vsel %vm686, %v1153, %v1165
        %v1253 = vsel %vm688, %v1250, %v1172
        %v1254 = vsel %vm688, %v1251, %v1173
        %v1255 = vsel %vm688, %v1252, %v1174
        %v1256 = vsel %vm1038, %v1253, %v1178
        %v1257 = vsel %vm1038, %v1254, %v1179
        %v1258 = vsel %vm1038, %v1255, %v1180
        %v1259 = vsel %vm1042, %v1256, %v1184
        %v1260 = vsel %vm1042, %v1257, %v1185
        %v1261 = vsel %vm1042, %v1258, %v1186
        %v1262 = vsel %vm1046, %v1259, %v1190
        %v1263 = vsel %vm1046, %v1260, %v1191
        %v1264 = vsel %vm1046, %v1261, %v1192
        %v1265 = vsel %vm1050, %v1262, %v1196
        %v1266 = vsel %vm1050, %v1263, %v1197
        %v1267 = vsel %vm1050, %v1264, %v1198
        %v1268 = vsel %vm1054, %v1265, %v1202
        %v1269 = vsel %vm1054, %v1266, %v1203
        %v1270 = vsel %vm1054, %v1267, %v1204
        %v1271 = vsel %vm686, %v1208, %v1214
        %v1272 = vsel %vm686, %v1209, %v1215
        %v1273 = vsel %vm686, %v1210, %v1216
        %v1274 = vsel %vm688, %v1271, %v1220
        %v1275 = vsel %vm688, %v1272, %v1221
        %v1276 = vsel %vm688, %v1273, %v1222
        %v1277 = vsel %vm1038, %v1274, %v1226
        %v1278 = vsel %vm1038, %v1275, %v1227
        %v1279 = vsel %vm1038, %v1276, %v1228
        %v1280 = vsel %vm1042, %v1277, %v1232
        %v1281 = vsel %vm1042, %v1278, %v1233
        %v1282 = vsel %vm1042, %v1279, %v1234
        %v1283 = vsel %vm1046, %v1280, %v1238
        %v1284 = vsel %vm1046, %v1281, %v1239
        %v1285 = vsel %vm1046, %v1282, %v1240
        %v1286 = vsel %vm1050, %v1283, %v1244
        %v1287 = vsel %vm1050, %v1284, %v1245
        %v1288 = vsel %vm1050, %v1285, %v1246
        %v1289 = vsel %vm1054, %v1286, %v1157
        %v1290 = vsel %vm1054, %v1287, %v1158
        %v1291 = vsel %vm1054, %v1288, %v1159
        %v1292 = vld [vmem:[%s1] sm:$0xf]
        %v1293 = vld [vmem:[%s1 + $0x4] sm:$0xf]
        %v1294 = vunpack.c.l.bf16 %v1292
        %v1295 = vunpack.c.l.bf16 %v1293
        %vm1296 = vcmask 130048
        %v1298 = vsel %vm1296, %v1268, 0
        %v1301 = vsel %vm1296, %v1289, 0
        %v1304 = vsel %vm1296, %v1269, 0
        %v1307 = vsel %vm1296, %v1290, 0
        %v1310 = vsel %vm1296, %v1270, 0
        %v1313 = vsel %vm1296, %v1291, 0
        %1315 = vmatprep.subr.mxu0 0.0
        %1316 = vmatpush1.msra.mxu0 %v1294
        %1317 = vmatprep.subr.mxu0 0.0
        %1318 = vmatpush1.msra.mxu0 %v1295
        %1319 = vmatprep.subr.mxu0 0.0
        %1320 = vmatpush1.msra.mxu0 0.0
        %1321 = vmatprep.subr.mxu0 0.0
        %1322 = vmatpush1.msra.mxu0 0.0
        %1323 = vmatprep.subr.mxu0 0.0
        %1324 = vmatpush1.msra.mxu0 0.0
        %1325 = vmatprep.subr.mxu0 0.0
        %1326 = vmatpush1.msra.mxu0 0.0
        %1327 = vmatprep.subr.mxu0 0.0
        %1328 = vmatpush1.msra.mxu0 0.0
        %1329 = vmatprep.subr.mxu0 0.0
        %1330 = vmatpush1.msra.mxu0 0.0
        %1331 = vmatprep.subr.mxu0 0.0
        %1332 = vmatpush1.msra.mxu0 0.0
        %1333 = vmatprep.subr.mxu0 0.0
        %1334 = vmatpush1.msra.mxu0 0.0
        %1335 = vmatprep.subr.mxu0 0.0
        %1336 = vmatpush1.msra.mxu0 0.0
        %1337 = vmatprep.subr.mxu0 0.0
        %1338 = vmatpush1.msra.mxu0 0.0
        %1339 = vmatprep.subr.mxu0 0.0
        %1340 = vmatpush1.msra.mxu0 0.0
        %1341 = vmatprep.subr.mxu0 0.0
        %1342 = vmatpush1.msra.mxu0 0.0
        %1343 = vmatprep.subr.mxu0 0.0
        %1344 = vmatpush1.msra.mxu0 0.0
        %1345 = vmatprep.subr.mxu0 0.0
        %1346 = vmatpush1.msra.mxu0 0.0
        %1347 = vmatprep.subr.mxu0 0.0
        %1348 = vmatpush1.msra.mxu0 0.0
        %1349 = vmatprep.subr.mxu0 0.0
        %1350 = vmatpush1.msra.mxu0 0.0
        %1351 = vmatprep.subr.mxu0 0.0
        %1352 = vmatpush1.msra.mxu0 0.0
        %1353 = vmatprep.subr.mxu0 0.0
        %1354 = vmatpush1.msra.mxu0 0.0
        %1355 = vmatprep.subr.mxu0 0.0
        %1356 = vmatpush1.msra.mxu0 0.0
        %1357 = vmatprep.subr.mxu0 0.0
        %1358 = vmatpush1.msra.mxu0 0.0
        %1359 = vmatprep.subr.mxu0 0.0
        %1360 = vmatpush1.msra.mxu0 0.0
        %1361 = vmatprep.subr.mxu0 0.0
        %1362 = vmatpush1.msra.mxu0 0.0
        %1363 = vmatprep.subr.mxu0 0.0
        %1364 = vmatpush1.msra.mxu0 0.0
        %1365 = vmatprep.subr.mxu0 0.0
        %1366 = vmatpush1.msra.mxu0 0.0
        %1367 = vmatprep.subr.mxu0 0.0
        %1368 = vmatpush1.msra.mxu0 0.0
        %1369 = vmatprep.subr.mxu0 0.0
        %1370 = vmatpush1.msra.mxu0 0.0
        %1371 = vmatprep.subr.mxu0 0.0
        %1372 = vmatpush1.msra.mxu0 0.0
        %1373 = vmatprep.subr.mxu0 0.0
        %1374 = vmatpush1.msra.mxu0 0.0
        %1375 = vmatprep.subr.mxu0 0.0
        %1376 = vmatpush1.msra.mxu0 0.0
        %1377 = vmatprep.subr.mxu0 0.0
        %1378 = vmatpush1.msra.mxu0 0.0
        %1379 = vmatprep.mubr.f32.mxu0 0.0
        %1380 = vmatmul.mubr.f32.gmra.mrb[0].mxu0 %v1298
        %v1381 = vpop.f32.mrb[0].mxu0
        %v1382 = vadd.f32 0.0, %v1381
        %v1383 = vpop.f32.mrb[0].mxu0
        %1384 = vmatprep.mubr.f32.mxu0 0.0
        %1385 = vmatmul.mubr.f32.gmra.mrb[0].mxu0 %v1301
        %v1386 = vpop.f32.mrb[0].mxu0
        %v1387 = vadd.f32 0.0, %v1386
        %v1388 = vpop.f32.mrb[0].mxu0
        %1389 = vmatprep.mubr.f32.mxu0 0.0
        %1390 = vmatmul.mubr.f32.gmra.mrb[0].mxu0 %v1304
        %v1391 = vpop.f32.mrb[0].mxu0
        %v1392 = vadd.f32 0.0, %v1391
        %v1393 = vpop.f32.mrb[0].mxu0
        %1394 = vmatprep.mubr.f32.mxu0 0.0
        %1395 = vmatmul.mubr.f32.gmra.mrb[0].mxu0 %v1307
        %v1396 = vpop.f32.mrb[0].mxu0
        %v1397 = vadd.f32 0.0, %v1396
        %v1398 = vpop.f32.mrb[0].mxu0
        %1399 = vmatprep.mubr.f32.mxu0 0.0
        %1400 = vmatmul.mubr.f32.gmra.mrb[0].mxu0 %v1310
        %v1401 = vpop.f32.mrb[0].mxu0
        %v1402 = vadd.f32 0.0, %v1401
        %v1403 = vpop.f32.mrb[0].mxu0
        %1404 = vmatprep.mubr.f32.mxu0 0.0
        %1405 = vmatmul.mubr.f32.gmra.mrb[0].mxu0 %v1313
        %v1406 = vpop.f32.mrb[0].mxu0
        %v1407 = vadd.f32 0.0, %v1406
        %v1408 = vpop.f32.mrb[0].mxu0
        %1409 = vdwg.mxu0
        %vm1410 = vcmask 261120
        %1411 = vst.msk [vmem:[%s449] sm:$0xff] %vm1410, %v1382
        %1412 = vst.msk [vmem:[%s449 + $0x8] sm:$0xff] %vm1410, %v1387
        %1413 = vst.msk [vmem:[%s449 + $0x10] sm:$0xff] %vm1410, %v1392
        %1414 = vst.msk [vmem:[%s449 + $0x18] sm:$0xff] %vm1410, %v1397
        %1415 = vst.msk [vmem:[%s449 + $0x20] sm:$0xff] %vm1410, %v1402
        %1416 = vst.msk [vmem:[%s449 + $0x28] sm:$0xff] %vm1410, %v1407
        %s1417 = sand.u32 %s255, 1
        %s1418 = scalar_lea.sflag [#allocation3], %s1417
        %s1419 = sand.u32 %s255, 1
        %s1420 = smul.addr %s1419, 48
        %s1421 = scalar_lea.vmem [#allocation5], %s1420
        // Predicated region
        $region57: #{rgb_block_forward.1} parent=51 // pred_check
          %p1422 = pneg %p265
        $region58: #{rgb_block_forward.1} parent=51 // pred_check_branch
          %1424 = sbr.rel (%p1422) target = $region60
        $region59: #{rgb_block_forward.1} parent=51 // pred_region
          #allocation7 [shape = 'u32[6]{0}', space=smem, size = 0x18, scoped, tag = 'DMA stride descriptor']
          %s1425 = smul.u32 2, %s28
          %s1427 = ssub.s32 768, 768
          %1428 = vsyncadd %s1418, %s1427
          %s1429 = smul.addr %s27, 12
          %s1430 = sadd.s32 %s1425, %s1429
          %s1431 = smul.addr %s1430, 128
          %s1432 = scalar_lea.hbm %s8, %s1431
          %s1434 = sshll.u32 1, 14
          %s1435 = sxor.u32 4294967295, %s1434
          %s1438 = sshll.u32 7, 18
          %s1439 = sxor.u32 4294967295, %s1438
          %s1440 = sand.u32 0, %s1439
          %s1442 = sor.u32 %s1440, 0
          %s1444 = sshll.u32 3, 24
          %s1445 = sxor.u32 4294967295, %s1444
          %s1446 = sand.u32 %s1442, %s1445
          %s1448 = sor.u32 %s1446, 0
          %s1449 = sshll.u32 %s1421, 4
          %s1450 = int_to_ptr.vmem [resolvable:$true] %s1449
          %1456 = sst [smem:[#allocation7]] 256
          %s1457 = scalar_lea.smem [#allocation7], 1
          %1458 = sst [smem:[%s1457]] 512
          %s1459 = scalar_lea.smem [#allocation7], 2
          %1460 = sst [smem:[%s1459]] 2
          %s1461 = scalar_lea.smem [#allocation7], 3
          %1462 = sst [smem:[%s1461]] 128
          %s1463 = scalar_lea.smem [#allocation7], 4
          %1464 = sst [smem:[%s1463]] 128
          %s1465 = scalar_lea.smem [#allocation7], 5
          %1466 = sst [smem:[%s1465]] 8
          %1468 = dma.general %s1450, 768, %s1432, %s1418, [#allocation6], [#allocation7], %s1448, 0
        $region60: #{rgb_block_forward.1} parent=51 // pred_fallthru
          _
      $region52: #{rgb_block_forward.1} parent=5 // pred_fallthru
        _
      %p1469 = scmp.le.s32.totalorder 2, %s18
      // Predicated region
      $region61: #{rgb_block_forward.1} parent=5 // pred_check
        %p1470 = pneg %p1469
      $region62: #{rgb_block_forward.1} parent=5 // pred_check_branch
        %1472 = sbr.rel (%p1470) target = $region64
      $region63: #{rgb_block_forward.1} parent=5 // pred_region
        %s1473 = ssub.s32 %s18, 2
        // Predicated region
        $region65: #{rgb_block_forward.1} parent=63 // pred_check
          %p1474 = pneg %p271
        $region66: #{rgb_block_forward.1} parent=63 // pred_check_branch
          %1476 = sbr.rel (%p1474) target = $region68
        $region67: #{rgb_block_forward.1} parent=63 // pred_region
          %s1477 = sand.u32 %s256, 1
          %s1478 = scalar_lea.sflag [#allocation3], %s1477
          %s1479 = sand.u32 %s256, 1
          %s1480 = smul.addr %s1479, 48
          %s1481 = scalar_lea.vmem [#allocation5], %s1480
          %1482 = dma.done %s1478, 768
        $region68: #{rgb_block_forward.1} parent=63 // pred_fallthru
          _
      $region64: #{rgb_block_forward.1} parent=5 // pred_fallthru
        _
    $region6: #{rgb_block_forward.1} parent=1 // loop_footer
      %s22 = sadd.s32 1, %s18
    $region7: #{rgb_block_forward.1} parent=1 // loop_footer_branch
      %17 = sbr.rel target = $region3
    $region8: #{rgb_block_forward.1} parent=1 // loop_exit
      _
    %1483 = vsyncpa [#allocation3], 1
    %s1484 = scalar_lea.sflag [#allocation3], 1
    %1485 = vsyncpa %s1484, 1
    %1486 = vsyncpa [#allocation4], 1
    %s1487 = scalar_lea.sflag [#allocation4], 1
    %1488 = vsyncpa %s1487, 1

</llo_original>
